<compile_context>
chip_gen: v6e
topology: v6e:2x2x1
jax: 0.10.0
libtpu: 0.0.40
codegen_flags: <defaults>
</compile_context>

<pallas_src>
import functools

import numpy as np
import jax
import jax.numpy as jnp
from jax.experimental import pallas as pl
from jax.experimental.pallas import tpu as pltpu

B = 2          # demo batch
H = W = 4      # board_size
CIN = 4        # input channels
N_ACT = 4      # number_of_actions

# ---------------- packed-parameter layout (static row-offset table) ----------
_PACK_WIDTH = 64                       # lane width of the packed parameter slab


def _align8(n):
    return (n + 7) // 8 * 8


def _round_up(n, m):
    return (n + m - 1) // m * m


# (name, rows, cols) in kernel layout, packing order
_PARAM_LAYOUT = (
    ("w1",   2 * 2 * CIN, 32), ("b1",   1, 32),
    ("se1a", 32, 32),          ("se1b", 32, 32),
    ("w2",   2 * 2 * 32, 64),  ("b2",   1, 64),
    ("se2a", 64, 64),          ("se2b", 64, 64),
    ("w3",   2 * 2 * 64, 64),  ("b3",   1, 64),
    ("se3a", 64, 64),          ("se3b", 64, 64),
    ("wfc",  2 * 2 * 64, N_ACT), ("bfc", 1, N_ACT),
)


def _build_offsets():
    offs, off = {}, 0
    for name, rows, cols in _PARAM_LAYOUT:
        offs[name] = (off, rows, cols)
        off += _align8(rows)           # keep every section sublane-tile aligned
    return offs, off


_PARAM_OFFSETS, _PARAM_ROWS = _build_offsets()   # 1008 rows total


# --------------------------------- kernel ------------------------------------
def player_kernel(x_ref, p_ref, out_ref, *, bt):
    """x_ref: (9, bt, 16) stage-1 im2col patches (position-major, bt % 8 == 0);
       p_ref: (_PARAM_ROWS, 64) packed parameter slab; out_ref: (bt, 4)."""
    f32 = jnp.float32

    def par(name):
        off, rows, cols = _PARAM_OFFSETS[name]
        return p_ref[off:off + rows, 0:cols]

    def w_tap(name, tap, cin):
        off, _, cols = _PARAM_OFFSETS[name]
        lo = off + tap * cin                       # 8-row aligned by layout
        return p_ref[lo:lo + cin, 0:cols]

    def se_gate(pool_sum, aname, bname):
        # SEBlock: (sum-pool; 1/npos baked into se*a) -> FC -> ReLU -> FC -> sigmoid
        hid = jnp.maximum(
            jnp.dot(pool_sum, par(aname), preferred_element_type=f32), 0.0)
        return jax.nn.sigmoid(
            jnp.dot(hid, par(bname), preferred_element_type=f32))

    # ---- stage 1: conv1(4->32), all 9 positions in ONE matmul, fused SE ----
    x_cols = x_ref[...].reshape(9 * bt, 2 * 2 * CIN)
    o1 = jnp.maximum(
        jnp.dot(x_cols, par("w1"), preferred_element_type=f32) + par("b1"),
        0.0).reshape(9, bt, 32)
    y1 = se_gate(jnp.sum(o1, axis=0), "se1a", "se1b")          # (bt, 32)
    o1s = o1 * o1 * y1[None, :, :]                              # out * se(out)
    o1g = o1s.reshape(3, 3 * bt, 32)                            # grid-row major

    # ---- stage 2: conv2(32->64) as sum-over-taps (no concats), fused SE ----
    acc2 = jnp.zeros((4 * bt, 64), f32)
    for dy in (0, 1):
        for dx in (0, 1):
            cols = o1g[dy:dy + 2, dx * bt:(dx + 2) * bt, :].reshape(4 * bt, 32)
            acc2 = acc2 + jnp.dot(cols, w_tap("w2", dy * 2 + dx, 32),
                                  preferred_element_type=f32)
    o2 = jnp.maximum(acc2 + par("b2"), 0.0).reshape(4, bt, 64)
    y2 = se_gate(jnp.sum(o2, axis=0), "se2a", "se2b")           # (bt, 64)
    o2s = o2 * o2 * y2[None, :, :]                              # == copy3 in torch
    o2g = o2s.reshape(2, 2 * bt, 64)

    # ---- stage 3: conv3(64->64), single output position, sum-over-taps -----
    acc3 = jnp.zeros((bt, 64), f32)
    for dy in (0, 1):
        for dx in (0, 1):
            cols = o2g[dy, dx * bt:(dx + 1) * bt, :]            # (bt, 64)
            acc3 = acc3 + jnp.dot(cols, w_tap("w3", dy * 2 + dx, 64),
                                  preferred_element_type=f32)
    o3 = jnp.maximum(acc3 + par("b3"), 0.0)                     # (bt, 64)

    # SE3 acts on copy3 (= o2s); out = o3 * (copy3 * y3) broadcast over pos.
    y3 = se_gate(jnp.sum(o2s, axis=0), "se3a", "se3b")          # (bt, 64)
    common = o3 * y3                                            # reused 4x

    # ---- FC(256 -> 4) as sum over positions (wfc rows pre-permuted) --------
    logits = jnp.zeros((bt, N_ACT), f32) + par("bfc")
    for pos in range(4):
        logits = logits + jnp.dot(common * o2s[pos],
                                  w_tap("wfc", pos, 64),
                                  preferred_element_type=f32)

    # softmax (exact divide; outputs are tiny, keep f32 accuracy)
    m = jnp.max(logits, axis=-1, keepdims=True)
    e = jnp.exp(logits - m)
    out_ref[...] = e / jnp.sum(e, axis=-1, keepdims=True)


# --------------------------------- wrappers ----------------------------------
def prepare_params(tp):
    """One-time torch-layout -> kernel-layout conversion and packing into a
    single VMEM slab (hoisted out of the per-call forward path).  The SE
    first-FC weights absorb the average-pool 1/npos factors."""
    def conv_w(w_oihw):
        cout = w_oihw.shape[0]
        # OIHW -> (dy, dx, cin, cout) -> (dy*dx*cin, cout); rows = tap*cin + c
        return jnp.transpose(w_oihw, (2, 3, 1, 0)).reshape(-1, cout)

    kp = {
        "w1": conv_w(tp["W1"]), "b1": tp["B1"].reshape(1, -1),
        "se1a": tp["SE1A"].T / 9.0, "se1b": tp["SE1B"].T,
        "w2": conv_w(tp["W2"]), "b2": tp["B2"].reshape(1, -1),
        "se2a": tp["SE2A"].T / 4.0, "se2b": tp["SE2B"].T,
        "w3": conv_w(tp["W3"]), "b3": tp["B3"].reshape(1, -1),
        "se3a": tp["SE3A"].T / 4.0, "se3b": tp["SE3B"].T,
        # torch flatten of (B,64,2,2) is index c*4 + h*2 + w; reorder rows to
        # pos*64 + c (pos = h*2 + w) to match the kernel's position-major sum.
        "wfc": jnp.transpose(tp["WFC"].reshape(N_ACT, 64, 2, 2),
                             (2, 3, 1, 0)).reshape(2 * 2 * 64, N_ACT),
        "bfc": tp["BFC"].reshape(1, -1),
    }
    buf = jnp.zeros((_PARAM_ROWS, _PACK_WIDTH), jnp.float32)
    for name, rows, cols in _PARAM_LAYOUT:
        off = _PARAM_OFFSETS[name][0]
        buf = buf.at[off:off + rows, :cols].set(kp[name].astype(jnp.float32))
    return buf


def _im2col_input(x_nchw):
    """(Bp,4,4,4) NCHW -> (9, Bp, 16); [pos, b, dy*8+dx*4+cin]."""
    bp = x_nchw.shape[0]
    x = jnp.transpose(x_nchw, (0, 2, 3, 1))               # NHWC
    cols = [x[:, i:i + 2, j:j + 2, :].reshape(bp, 2 * 2 * CIN)
            for i in range(H - 1) for j in range(W - 1)]
    return jnp.stack(cols, axis=0)


def player_forward_pallas(x_nchw, packed_params):
    batch = x_nchw.shape[0]
    bt = min(_round_up(batch, 8), 128)        # per-grid-step batch block
    bp = _round_up(batch, bt)                 # padded batch (multiple of 8)
    if bp != batch:
        x_nchw = jnp.pad(x_nchw, ((0, bp - batch), (0, 0), (0, 0), (0, 0)))
    x_cols = _im2col_input(x_nchw)            # (9, bp, 16); tiny, done in XLA

    out = pl.pallas_call(
        functools.partial(player_kernel, bt=bt),
        out_shape=jax.ShapeDtypeStruct((bp, N_ACT), jnp.float32),
        grid=(bp // bt,),
        in_specs=[
            pl.BlockSpec((9, bt, 2 * 2 * CIN), lambda i: (0, i, 0)),
            # constant block index -> 258 KB param slab stays VMEM-resident
            pl.BlockSpec((_PARAM_ROWS, _PACK_WIDTH), lambda i: (0, 0)),
        ],
        out_specs=pl.BlockSpec((bt, N_ACT), lambda i: (i, 0)),
        compiler_params=pltpu.CompilerParams(
            dimension_semantics=("parallel",)),
    )(x_cols, packed_params)
    return out[:batch]


# ---------------------- pure-JAX reference (torch semantics) -----------------
def player_forward_ref(x, tp):
    def conv(x, w, b):
        y = jax.lax.conv_general_dilated(
            x, w, (1, 1), "VALID",
            dimension_numbers=("NCHW", "OIHW", "NCHW"))
        return y + b[None, :, None, None]

    def se(x, wa, wb):
        v = jnp.mean(x, axis=(2, 3))
        h = jnp.maximum(v @ wa.T, 0.0)
        y = jax.nn.sigmoid(h @ wb.T)
        return x * y[:, :, None, None]

    o = jnp.maximum(conv(x, tp["W1"], tp["B1"]), 0.0)
    o = o * se(o, tp["SE1A"], tp["SE1B"])
    o = jnp.maximum(conv(o, tp["W2"], tp["B2"]), 0.0)
    o = o * se(o, tp["SE2A"], tp["SE2B"])
    c3 = o
    o = jnp.maximum(conv(o, tp["W3"], tp["B3"]), 0.0)
    o = o * se(c3, tp["SE3A"], tp["SE3B"])
    flat = o.reshape(o.shape[0], -1)
    logits = flat @ tp["WFC"].T + tp["BFC"]
    return jax.nn.softmax(logits, axis=1)


def make_params(key):
    ks = jax.random.split(key, 14)
    s = 0.1
    return {
        "W1": s * jax.random.normal(ks[0], (32, CIN, 2, 2), jnp.float32),
        "B1": s * jax.random.normal(ks[1], (32,), jnp.float32),
        "SE1A": s * jax.random.normal(ks[2], (32, 32), jnp.float32),
        "SE1B": s * jax.random.normal(ks[3], (32, 32), jnp.float32),
        "W2": s * jax.random.normal(ks[4], (64, 32, 2, 2), jnp.float32),
        "B2": s * jax.random.normal(ks[5], (64,), jnp.float32),
        "SE2A": s * jax.random.normal(ks[6], (64, 64), jnp.float32),
        "SE2B": s * jax.random.normal(ks[7], (64, 64), jnp.float32),
        "W3": s * jax.random.normal(ks[8], (64, 64, 2, 2), jnp.float32),
        "B3": s * jax.random.normal(ks[9], (64,), jnp.float32),
        "SE3A": s * jax.random.normal(ks[10], (64, 64), jnp.float32),
        "SE3B": s * jax.random.normal(ks[11], (64, 64), jnp.float32),
        "WFC": s * jax.random.normal(ks[12], (N_ACT, 256), jnp.float32),
        "BFC": s * jax.random.normal(ks[13], (N_ACT,), jnp.float32),
    }


if __name__ == "__main__":
    key = jax.random.PRNGKey(0)
    k_x, k_p = jax.random.split(key)
    x = jax.random.normal(k_x, (B, CIN, H, W), jnp.float32)   # NCHW like torch
    params = make_params(k_p)

    # one-time (model-load time) parameter conversion + packing
    packed = jax.block_until_ready(prepare_params(params))

    fwd = jax.jit(player_forward_pallas)
    out = jax.block_until_ready(fwd(x, packed))

    ref = jax.block_until_ready(player_forward_ref(x, params))
    assert out.shape == (B, N_ACT)
    np.testing.assert_allclose(np.asarray(out), np.asarray(ref),
                               rtol=1e-4, atol=1e-5)
    print("KERNEL_OK")
</pallas_src>

<mosaic_0001>
module attributes {stable_mosaic.version = 11 : i64} {
  func.func @player_kernel(%arg0: i32, %arg1: memref<9x8x16xf32, #tpu.memory_space<vmem>>, %arg2: memref<1008x64xf32, #tpu.memory_space<vmem>>, %arg3: memref<8x4xf32, #tpu.memory_space<vmem>>) attributes {dimension_semantics = [#tpu.dimension_semantics<parallel>], iteration_bounds = array<i64: 1>, scalar_prefetch = 0 : i64, scratch_operands = 0 : i64, tpu.core_type = #tpu.core_type<tc>, window_params = [{transform_indices = @transform_0, window_bounds = array<i64: 9, 8, 16>}, {pipeline_mode = #tpu.pipeline_mode<synchronous>, transform_indices = @transform_1, window_bounds = array<i64: 1008, 64>}, {transform_indices = @transform_2, window_bounds = array<i64: 8, 4>}]} {
    %c0 = arith.constant 0 : index
    %c0_0 = arith.constant 0 : index
    %c0_1 = arith.constant 0 : index
    %0 = vector.load %arg1[%c0, %c0_0, %c0_1] : memref<9x8x16xf32, #tpu.memory_space<vmem>>, vector<9x8x16xf32>
    %1 = vector.shape_cast %0 : vector<9x8x16xf32> to vector<72x16xf32>
    %c0_2 = arith.constant 0 : index
    %c0_3 = arith.constant 0 : index
    %2 = vector.load %arg2[%c0_2, %c0_3] : memref<1008x64xf32, #tpu.memory_space<vmem>>, vector<16x32xf32>
    %cst = arith.constant dense<0.000000e+00> : vector<72x32xf32>
    %3 = tpu.matmul %1, %2, %cst {dimension_numbers = #tpu.dot_dimension_numbers<[1], [0], [0], [1], [0, 0, 1, 1], [], []>} : vector<72x16xf32>, vector<16x32xf32>, vector<72x32xf32> -> vector<72x32xf32>
    %c16 = arith.constant 16 : index
    %c0_4 = arith.constant 0 : index
    %4 = vector.load %arg2[%c16, %c0_4] : memref<1008x64xf32, #tpu.memory_space<vmem>>, vector<1x32xf32>
    %5 = vector.broadcast %4 : vector<1x32xf32> to vector<72x32xf32>
    %6 = arith.addf %3, %5 : vector<72x32xf32>
    %cst_5 = arith.constant 0.000000e+00 : f32
    %7 = vector.broadcast %cst_5 : f32 to vector<72x32xf32>
    %8 = arith.maximumf %6, %7 : vector<72x32xf32>
    %9 = vector.shape_cast %8 : vector<72x32xf32> to vector<9x8x32xf32>
    %cst_6 = arith.constant dense<0.000000e+00> : vector<8x32xf32>
    %10 = vector.multi_reduction <add>, %9, %cst_6 [0] : vector<9x8x32xf32> to vector<8x32xf32>
    %c24 = arith.constant 24 : index
    %c0_7 = arith.constant 0 : index
    %11 = vector.load %arg2[%c24, %c0_7] : memref<1008x64xf32, #tpu.memory_space<vmem>>, vector<32x32xf32>
    %cst_8 = arith.constant dense<0.000000e+00> : vector<8x32xf32>
    %12 = tpu.matmul %10, %11, %cst_8 {dimension_numbers = #tpu.dot_dimension_numbers<[1], [0], [0], [1], [0, 0, 1, 1], [], []>} : vector<8x32xf32>, vector<32x32xf32>, vector<8x32xf32> -> vector<8x32xf32>
    %cst_9 = arith.constant 0.000000e+00 : f32
    %13 = vector.broadcast %cst_9 : f32 to vector<8x32xf32>
    %14 = arith.maximumf %12, %13 : vector<8x32xf32>
    %c56 = arith.constant 56 : index
    %c0_10 = arith.constant 0 : index
    %15 = vector.load %arg2[%c56, %c0_10] : memref<1008x64xf32, #tpu.memory_space<vmem>>, vector<32x32xf32>
    %cst_11 = arith.constant dense<0.000000e+00> : vector<8x32xf32>
    %16 = tpu.matmul %14, %15, %cst_11 {dimension_numbers = #tpu.dot_dimension_numbers<[1], [0], [0], [1], [0, 0, 1, 1], [], []>} : vector<8x32xf32>, vector<32x32xf32>, vector<8x32xf32> -> vector<8x32xf32>
    %17 = arith.negf %16 : vector<8x32xf32>
    %18 = math.exp %17 : vector<8x32xf32>
    %cst_12 = arith.constant 1.000000e+00 : f32
    %19 = vector.broadcast %cst_12 : f32 to vector<8x32xf32>
    %20 = arith.addf %19, %18 : vector<8x32xf32>
    %21 = arith.divf %19, %20 : vector<8x32xf32>
    %22 = arith.mulf %9, %9 : vector<9x8x32xf32>
    %23 = vector.shape_cast %21 : vector<8x32xf32> to vector<1x8x32xf32>
    %24 = vector.broadcast %23 : vector<1x8x32xf32> to vector<9x8x32xf32>
    %25 = arith.mulf %22, %24 : vector<9x8x32xf32>
    %26 = vector.shape_cast %25 : vector<9x8x32xf32> to vector<3x24x32xf32>
    %cst_13 = arith.constant 0.000000e+00 : f32
    %27 = vector.broadcast %cst_13 : f32 to vector<32x64xf32>
    %28 = vector.extract_strided_slice %26 {offsets = [0, 0, 0], sizes = [2, 16, 32], strides = [1, 1, 1]} : vector<3x24x32xf32> to vector<2x16x32xf32>
    %29 = vector.shape_cast %28 : vector<2x16x32xf32> to vector<32x32xf32>
    %c88 = arith.constant 88 : index
    %c0_14 = arith.constant 0 : index
    %30 = vector.load %arg2[%c88, %c0_14] : memref<1008x64xf32, #tpu.memory_space<vmem>>, vector<32x64xf32>
    %cst_15 = arith.constant dense<0.000000e+00> : vector<32x64xf32>
    %31 = tpu.matmul %29, %30, %cst_15 {dimension_numbers = #tpu.dot_dimension_numbers<[1], [0], [0], [1], [0, 0, 1, 1], [], []>} : vector<32x32xf32>, vector<32x64xf32>, vector<32x64xf32> -> vector<32x64xf32>
    %32 = arith.addf %27, %31 : vector<32x64xf32>
    %33 = vector.extract_strided_slice %26 {offsets = [0, 8, 0], sizes = [2, 16, 32], strides = [1, 1, 1]} : vector<3x24x32xf32> to vector<2x16x32xf32>
    %34 = vector.shape_cast %33 : vector<2x16x32xf32> to vector<32x32xf32>
    %c120 = arith.constant 120 : index
    %c0_16 = arith.constant 0 : index
    %35 = vector.load %arg2[%c120, %c0_16] : memref<1008x64xf32, #tpu.memory_space<vmem>>, vector<32x64xf32>
    %cst_17 = arith.constant dense<0.000000e+00> : vector<32x64xf32>
    %36 = tpu.matmul %34, %35, %cst_17 {dimension_numbers = #tpu.dot_dimension_numbers<[1], [0], [0], [1], [0, 0, 1, 1], [], []>} : vector<32x32xf32>, vector<32x64xf32>, vector<32x64xf32> -> vector<32x64xf32>
    %37 = arith.addf %32, %36 : vector<32x64xf32>
    %38 = vector.extract_strided_slice %26 {offsets = [1, 0, 0], sizes = [2, 16, 32], strides = [1, 1, 1]} : vector<3x24x32xf32> to vector<2x16x32xf32>
    %39 = vector.shape_cast %38 : vector<2x16x32xf32> to vector<32x32xf32>
    %c152 = arith.constant 152 : index
    %c0_18 = arith.constant 0 : index
    %40 = vector.load %arg2[%c152, %c0_18] : memref<1008x64xf32, #tpu.memory_space<vmem>>, vector<32x64xf32>
    %cst_19 = arith.constant dense<0.000000e+00> : vector<32x64xf32>
    %41 = tpu.matmul %39, %40, %cst_19 {dimension_numbers = #tpu.dot_dimension_numbers<[1], [0], [0], [1], [0, 0, 1, 1], [], []>} : vector<32x32xf32>, vector<32x64xf32>, vector<32x64xf32> -> vector<32x64xf32>
    %42 = arith.addf %37, %41 : vector<32x64xf32>
    %43 = vector.extract_strided_slice %26 {offsets = [1, 8, 0], sizes = [2, 16, 32], strides = [1, 1, 1]} : vector<3x24x32xf32> to vector<2x16x32xf32>
    %44 = vector.shape_cast %43 : vector<2x16x32xf32> to vector<32x32xf32>
    %c184 = arith.constant 184 : index
    %c0_20 = arith.constant 0 : index
    %45 = vector.load %arg2[%c184, %c0_20] : memref<1008x64xf32, #tpu.memory_space<vmem>>, vector<32x64xf32>
    %cst_21 = arith.constant dense<0.000000e+00> : vector<32x64xf32>
    %46 = tpu.matmul %44, %45, %cst_21 {dimension_numbers = #tpu.dot_dimension_numbers<[1], [0], [0], [1], [0, 0, 1, 1], [], []>} : vector<32x32xf32>, vector<32x64xf32>, vector<32x64xf32> -> vector<32x64xf32>
    %47 = arith.addf %42, %46 : vector<32x64xf32>
    %c216 = arith.constant 216 : index
    %c0_22 = arith.constant 0 : index
    %48 = vector.load %arg2[%c216, %c0_22] : memref<1008x64xf32, #tpu.memory_space<vmem>>, vector<1x64xf32>
    %49 = vector.broadcast %48 : vector<1x64xf32> to vector<32x64xf32>
    %50 = arith.addf %47, %49 : vector<32x64xf32>
    %cst_23 = arith.constant 0.000000e+00 : f32
    %51 = vector.broadcast %cst_23 : f32 to vector<32x64xf32>
    %52 = arith.maximumf %50, %51 : vector<32x64xf32>
    %53 = vector.shape_cast %52 : vector<32x64xf32> to vector<4x8x64xf32>
    %cst_24 = arith.constant dense<0.000000e+00> : vector<8x64xf32>
    %54 = vector.multi_reduction <add>, %53, %cst_24 [0] : vector<4x8x64xf32> to vector<8x64xf32>
    %c224 = arith.constant 224 : index
    %c0_25 = arith.constant 0 : index
    %55 = vector.load %arg2[%c224, %c0_25] : memref<1008x64xf32, #tpu.memory_space<vmem>>, vector<64x64xf32>
    %cst_26 = arith.constant dense<0.000000e+00> : vector<8x64xf32>
    %56 = tpu.matmul %54, %55, %cst_26 {dimension_numbers = #tpu.dot_dimension_numbers<[1], [0], [0], [1], [0, 0, 1, 1], [], []>} : vector<8x64xf32>, vector<64x64xf32>, vector<8x64xf32> -> vector<8x64xf32>
    %cst_27 = arith.constant 0.000000e+00 : f32
    %57 = vector.broadcast %cst_27 : f32 to vector<8x64xf32>
    %58 = arith.maximumf %56, %57 : vector<8x64xf32>
    %c288 = arith.constant 288 : index
    %c0_28 = arith.constant 0 : index
    %59 = vector.load %arg2[%c288, %c0_28] : memref<1008x64xf32, #tpu.memory_space<vmem>>, vector<64x64xf32>
    %cst_29 = arith.constant dense<0.000000e+00> : vector<8x64xf32>
    %60 = tpu.matmul %58, %59, %cst_29 {dimension_numbers = #tpu.dot_dimension_numbers<[1], [0], [0], [1], [0, 0, 1, 1], [], []>} : vector<8x64xf32>, vector<64x64xf32>, vector<8x64xf32> -> vector<8x64xf32>
    %61 = arith.negf %60 : vector<8x64xf32>
    %62 = math.exp %61 : vector<8x64xf32>
    %cst_30 = arith.constant 1.000000e+00 : f32
    %63 = vector.broadcast %cst_30 : f32 to vector<8x64xf32>
    %64 = arith.addf %63, %62 : vector<8x64xf32>
    %65 = arith.divf %63, %64 : vector<8x64xf32>
    %66 = arith.mulf %53, %53 : vector<4x8x64xf32>
    %67 = vector.shape_cast %65 : vector<8x64xf32> to vector<1x8x64xf32>
    %68 = vector.broadcast %67 : vector<1x8x64xf32> to vector<4x8x64xf32>
    %69 = arith.mulf %66, %68 : vector<4x8x64xf32>
    %70 = vector.shape_cast %69 : vector<4x8x64xf32> to vector<2x16x64xf32>
    %cst_31 = arith.constant 0.000000e+00 : f32
    %71 = vector.broadcast %cst_31 : f32 to vector<8x64xf32>
    %72 = vector.extract_strided_slice %70 {offsets = [0, 0, 0], sizes = [1, 8, 64], strides = [1, 1, 1]} : vector<2x16x64xf32> to vector<1x8x64xf32>
    %73 = vector.shape_cast %72 : vector<1x8x64xf32> to vector<8x64xf32>
    %c352 = arith.constant 352 : index
    %c0_32 = arith.constant 0 : index
    %74 = vector.load %arg2[%c352, %c0_32] : memref<1008x64xf32, #tpu.memory_space<vmem>>, vector<64x64xf32>
    %cst_33 = arith.constant dense<0.000000e+00> : vector<8x64xf32>
    %75 = tpu.matmul %73, %74, %cst_33 {dimension_numbers = #tpu.dot_dimension_numbers<[1], [0], [0], [1], [0, 0, 1, 1], [], []>} : vector<8x64xf32>, vector<64x64xf32>, vector<8x64xf32> -> vector<8x64xf32>
    %76 = arith.addf %71, %75 : vector<8x64xf32>
    %77 = vector.extract_strided_slice %70 {offsets = [0, 8, 0], sizes = [1, 8, 64], strides = [1, 1, 1]} : vector<2x16x64xf32> to vector<1x8x64xf32>
    %78 = vector.shape_cast %77 : vector<1x8x64xf32> to vector<8x64xf32>
    %c416 = arith.constant 416 : index
    %c0_34 = arith.constant 0 : index
    %79 = vector.load %arg2[%c416, %c0_34] : memref<1008x64xf32, #tpu.memory_space<vmem>>, vector<64x64xf32>
    %cst_35 = arith.constant dense<0.000000e+00> : vector<8x64xf32>
    %80 = tpu.matmul %78, %79, %cst_35 {dimension_numbers = #tpu.dot_dimension_numbers<[1], [0], [0], [1], [0, 0, 1, 1], [], []>} : vector<8x64xf32>, vector<64x64xf32>, vector<8x64xf32> -> vector<8x64xf32>
    %81 = arith.addf %76, %80 : vector<8x64xf32>
    %82 = vector.extract_strided_slice %70 {offsets = [1, 0, 0], sizes = [1, 8, 64], strides = [1, 1, 1]} : vector<2x16x64xf32> to vector<1x8x64xf32>
    %83 = vector.shape_cast %82 : vector<1x8x64xf32> to vector<8x64xf32>
    %c480 = arith.constant 480 : index
    %c0_36 = arith.constant 0 : index
    %84 = vector.load %arg2[%c480, %c0_36] : memref<1008x64xf32, #tpu.memory_space<vmem>>, vector<64x64xf32>
    %cst_37 = arith.constant dense<0.000000e+00> : vector<8x64xf32>
    %85 = tpu.matmul %83, %84, %cst_37 {dimension_numbers = #tpu.dot_dimension_numbers<[1], [0], [0], [1], [0, 0, 1, 1], [], []>} : vector<8x64xf32>, vector<64x64xf32>, vector<8x64xf32> -> vector<8x64xf32>
    %86 = arith.addf %81, %85 : vector<8x64xf32>
    %87 = vector.extract_strided_slice %70 {offsets = [1, 8, 0], sizes = [1, 8, 64], strides = [1, 1, 1]} : vector<2x16x64xf32> to vector<1x8x64xf32>
    %88 = vector.shape_cast %87 : vector<1x8x64xf32> to vector<8x64xf32>
    %c544 = arith.constant 544 : index
    %c0_38 = arith.constant 0 : index
    %89 = vector.load %arg2[%c544, %c0_38] : memref<1008x64xf32, #tpu.memory_space<vmem>>, vector<64x64xf32>
    %cst_39 = arith.constant dense<0.000000e+00> : vector<8x64xf32>
    %90 = tpu.matmul %88, %89, %cst_39 {dimension_numbers = #tpu.dot_dimension_numbers<[1], [0], [0], [1], [0, 0, 1, 1], [], []>} : vector<8x64xf32>, vector<64x64xf32>, vector<8x64xf32> -> vector<8x64xf32>
    %91 = arith.addf %86, %90 : vector<8x64xf32>
    %c608 = arith.constant 608 : index
    %c0_40 = arith.constant 0 : index
    %92 = vector.load %arg2[%c608, %c0_40] : memref<1008x64xf32, #tpu.memory_space<vmem>>, vector<1x64xf32>
    %93 = vector.broadcast %92 : vector<1x64xf32> to vector<8x64xf32>
    %94 = arith.addf %91, %93 : vector<8x64xf32>
    %cst_41 = arith.constant 0.000000e+00 : f32
    %95 = vector.broadcast %cst_41 : f32 to vector<8x64xf32>
    %96 = arith.maximumf %94, %95 : vector<8x64xf32>
    %cst_42 = arith.constant dense<0.000000e+00> : vector<8x64xf32>
    %97 = vector.multi_reduction <add>, %69, %cst_42 [0] : vector<4x8x64xf32> to vector<8x64xf32>
    %c616 = arith.constant 616 : index
    %c0_43 = arith.constant 0 : index
    %98 = vector.load %arg2[%c616, %c0_43] : memref<1008x64xf32, #tpu.memory_space<vmem>>, vector<64x64xf32>
    %cst_44 = arith.constant dense<0.000000e+00> : vector<8x64xf32>
    %99 = tpu.matmul %97, %98, %cst_44 {dimension_numbers = #tpu.dot_dimension_numbers<[1], [0], [0], [1], [0, 0, 1, 1], [], []>} : vector<8x64xf32>, vector<64x64xf32>, vector<8x64xf32> -> vector<8x64xf32>
    %cst_45 = arith.constant 0.000000e+00 : f32
    %100 = vector.broadcast %cst_45 : f32 to vector<8x64xf32>
    %101 = arith.maximumf %99, %100 : vector<8x64xf32>
    %c680 = arith.constant 680 : index
    %c0_46 = arith.constant 0 : index
    %102 = vector.load %arg2[%c680, %c0_46] : memref<1008x64xf32, #tpu.memory_space<vmem>>, vector<64x64xf32>
    %cst_47 = arith.constant dense<0.000000e+00> : vector<8x64xf32>
    %103 = tpu.matmul %101, %102, %cst_47 {dimension_numbers = #tpu.dot_dimension_numbers<[1], [0], [0], [1], [0, 0, 1, 1], [], []>} : vector<8x64xf32>, vector<64x64xf32>, vector<8x64xf32> -> vector<8x64xf32>
    %104 = arith.negf %103 : vector<8x64xf32>
    %105 = math.exp %104 : vector<8x64xf32>
    %cst_48 = arith.constant 1.000000e+00 : f32
    %106 = vector.broadcast %cst_48 : f32 to vector<8x64xf32>
    %107 = arith.addf %106, %105 : vector<8x64xf32>
    %108 = arith.divf %106, %107 : vector<8x64xf32>
    %109 = arith.mulf %96, %108 : vector<8x64xf32>
    %cst_49 = arith.constant 0.000000e+00 : f32
    %110 = vector.broadcast %cst_49 : f32 to vector<8x4xf32>
    %c1000 = arith.constant 1000 : index
    %c0_50 = arith.constant 0 : index
    %111 = vector.load %arg2[%c1000, %c0_50] : memref<1008x64xf32, #tpu.memory_space<vmem>>, vector<1x4xf32>
    %112 = vector.broadcast %111 : vector<1x4xf32> to vector<8x4xf32>
    %113 = arith.addf %110, %112 : vector<8x4xf32>
    %114 = vector.extract_strided_slice %69 {offsets = [0, 0, 0], sizes = [1, 8, 64], strides = [1, 1, 1]} : vector<4x8x64xf32> to vector<1x8x64xf32>
    %115 = vector.shape_cast %114 : vector<1x8x64xf32> to vector<8x64xf32>
    %116 = arith.mulf %109, %115 : vector<8x64xf32>
    %c744 = arith.constant 744 : index
    %c0_51 = arith.constant 0 : index
    %117 = vector.load %arg2[%c744, %c0_51] : memref<1008x64xf32, #tpu.memory_space<vmem>>, vector<64x4xf32>
    %cst_52 = arith.constant dense<0.000000e+00> : vector<8x4xf32>
    %118 = tpu.matmul %116, %117, %cst_52 {dimension_numbers = #tpu.dot_dimension_numbers<[1], [0], [0], [1], [0, 0, 1, 1], [], []>} : vector<8x64xf32>, vector<64x4xf32>, vector<8x4xf32> -> vector<8x4xf32>
    %119 = arith.addf %113, %118 : vector<8x4xf32>
    %120 = vector.extract_strided_slice %69 {offsets = [1, 0, 0], sizes = [1, 8, 64], strides = [1, 1, 1]} : vector<4x8x64xf32> to vector<1x8x64xf32>
    %121 = vector.shape_cast %120 : vector<1x8x64xf32> to vector<8x64xf32>
    %122 = arith.mulf %109, %121 : vector<8x64xf32>
    %c808 = arith.constant 808 : index
    %c0_53 = arith.constant 0 : index
    %123 = vector.load %arg2[%c808, %c0_53] : memref<1008x64xf32, #tpu.memory_space<vmem>>, vector<64x4xf32>
    %cst_54 = arith.constant dense<0.000000e+00> : vector<8x4xf32>
    %124 = tpu.matmul %122, %123, %cst_54 {dimension_numbers = #tpu.dot_dimension_numbers<[1], [0], [0], [1], [0, 0, 1, 1], [], []>} : vector<8x64xf32>, vector<64x4xf32>, vector<8x4xf32> -> vector<8x4xf32>
    %125 = arith.addf %119, %124 : vector<8x4xf32>
    %126 = vector.extract_strided_slice %69 {offsets = [2, 0, 0], sizes = [1, 8, 64], strides = [1, 1, 1]} : vector<4x8x64xf32> to vector<1x8x64xf32>
    %127 = vector.shape_cast %126 : vector<1x8x64xf32> to vector<8x64xf32>
    %128 = arith.mulf %109, %127 : vector<8x64xf32>
    %c872 = arith.constant 872 : index
    %c0_55 = arith.constant 0 : index
    %129 = vector.load %arg2[%c872, %c0_55] : memref<1008x64xf32, #tpu.memory_space<vmem>>, vector<64x4xf32>
    %cst_56 = arith.constant dense<0.000000e+00> : vector<8x4xf32>
    %130 = tpu.matmul %128, %129, %cst_56 {dimension_numbers = #tpu.dot_dimension_numbers<[1], [0], [0], [1], [0, 0, 1, 1], [], []>} : vector<8x64xf32>, vector<64x4xf32>, vector<8x4xf32> -> vector<8x4xf32>
    %131 = arith.addf %125, %130 : vector<8x4xf32>
    %132 = vector.extract_strided_slice %69 {offsets = [3, 0, 0], sizes = [1, 8, 64], strides = [1, 1, 1]} : vector<4x8x64xf32> to vector<1x8x64xf32>
    %133 = vector.shape_cast %132 : vector<1x8x64xf32> to vector<8x64xf32>
    %134 = arith.mulf %109, %133 : vector<8x64xf32>
    %c936 = arith.constant 936 : index
    %c0_57 = arith.constant 0 : index
    %135 = vector.load %arg2[%c936, %c0_57] : memref<1008x64xf32, #tpu.memory_space<vmem>>, vector<64x4xf32>
    %cst_58 = arith.constant dense<0.000000e+00> : vector<8x4xf32>
    %136 = tpu.matmul %134, %135, %cst_58 {dimension_numbers = #tpu.dot_dimension_numbers<[1], [0], [0], [1], [0, 0, 1, 1], [], []>} : vector<8x64xf32>, vector<64x4xf32>, vector<8x4xf32> -> vector<8x4xf32>
    %137 = arith.addf %131, %136 : vector<8x4xf32>
    %cst_59 = arith.constant dense<0xFF800000> : vector<8xf32>
    %138 = vector.multi_reduction <maximumf>, %137, %cst_59 [1] : vector<8x4xf32> to vector<8xf32>
    %139 = vector.shape_cast %138 : vector<8xf32> to vector<8x1xf32>
    %140 = vector.broadcast %139 : vector<8x1xf32> to vector<8x4xf32>
    %141 = arith.subf %137, %140 : vector<8x4xf32>
    %142 = math.exp %141 : vector<8x4xf32>
    %cst_60 = arith.constant dense<0.000000e+00> : vector<8xf32>
    %143 = vector.multi_reduction <add>, %142, %cst_60 [1] : vector<8x4xf32> to vector<8xf32>
    %144 = vector.shape_cast %143 : vector<8xf32> to vector<8x1xf32>
    %145 = vector.broadcast %144 : vector<8x1xf32> to vector<8x4xf32>
    %146 = arith.divf %142, %145 : vector<8x4xf32>
    %c0_61 = arith.constant 0 : index
    %c0_62 = arith.constant 0 : index
    %147 = vector.load %arg3[%c0_61, %c0_62] : memref<8x4xf32, #tpu.memory_space<vmem>>, vector<8x4xf32>
    tpu.vector_store %arg3[%c0_61, %c0_62], %146 {strides = array<i32>} : memref<8x4xf32, #tpu.memory_space<vmem>>, vector<8x4xf32>,
    return
  }
  func.func @transform_0(%arg0: i32) -> (i32, i32, i32) {
    %c0_i32 = arith.constant 0 : i32
    %c0_i32_0 = arith.constant 0 : i32
    %c0_i32_1 = arith.constant 0 : i32
    return %c0_i32, %arg0, %c0_i32_0 : i32, i32, i32
  }
  func.func @transform_1(%arg0: i32) -> (i32, i32) {
    %c0_i32 = arith.constant 0 : i32
    %c0_i32_0 = arith.constant 0 : i32
    %c0_i32_1 = arith.constant 0 : i32
    return %c0_i32, %c0_i32_0 : i32, i32
  }
  func.func @transform_2(%arg0: i32) -> (i32, i32) {
    %c0_i32 = arith.constant 0 : i32
    %c0_i32_0 = arith.constant 0 : i32
    return %arg0, %c0_i32 : i32, i32
  }
}

</mosaic_0001>

<llo_original>
// kernel: player_forward_pallas.1
$region0: #{player_forward_pallas.1}
  #allocation0 [shape = 'u32[]', space=smem, size = 0x4, offset = 0x4, fixed_abs, tag = 'smem constant byte address 0x4 - core index']
  #allocation1 [shape = 'u32[144,128]{1,0:T(1,128)}', space=vmem, size = 0x12000, scoped, tag = 'internal scratch']
  %s0 = inlined_call_operand.vmem [shape: f32[9,8,16], index: 0, kind: input, shape index: {}]
  %s1 = inlined_call_operand.vmem [shape: f32[1008,64], index: 1, kind: input, shape index: {}]
  %s2 = inlined_call_operand.vmem [shape: f32[8,4], index: 2, kind: output, shape index: {}]
  %s3 = sld [smem:[#allocation0]]
  $region18: #{player_forward_pallas.1} parent=0
    _
  %s5 = ssub.s32 1, %s3
  %s6 = scalar_select 0, %s5, %s3
  // Predicated region
  $region2: #{player_forward_pallas.1} parent=0 // pred_check
    _
  $region3: #{player_forward_pallas.1} parent=0 // pred_check_branch
    %8 = sbr.rel (0) target = $region5
  $region4: #{player_forward_pallas.1} parent=0 // pred_region
    _
  $region5: #{player_forward_pallas.1} parent=0 // pred_fallthru
    _
  // Predicated region
  $region6: #{player_forward_pallas.1} parent=0 // pred_check
    _
  $region7: #{player_forward_pallas.1} parent=0 // pred_check_branch
    %10 = sbr.rel (0) target = $region9
  $region8: #{player_forward_pallas.1} parent=0 // pred_region
    _
  $region9: #{player_forward_pallas.1} parent=0 // pred_fallthru
    _
  %v11 = vld [vmem:[%s0] sm:$0xff]
  %v12 = vld [vmem:[%s0 + $0x8] sm:$0xff]
  %v13 = vld [vmem:[%s0 + $0x10] sm:$0xff]
  %v14 = vld [vmem:[%s0 + $0x18] sm:$0xff]
  %v15 = vld [vmem:[%s0 + $0x20] sm:$0xff]
  %v16 = vld [vmem:[%s0 + $0x28] sm:$0xff]
  %v17 = vld [vmem:[%s0 + $0x30] sm:$0xff]
  %v18 = vld [vmem:[%s0 + $0x38] sm:$0xff]
  %v19 = vld [vmem:[%s0 + $0x40] sm:$0xff]
  %v20 = vld [vmem:[%s1] sm:$0xff]
  %v21 = vld [vmem:[%s1 + $0x8] sm:$0xff]
  %v22 = vld [vmem:[%s1 + $0x10] sm:$0x1]
  %v23 = vlaneseq
  %v24 = vshrl.u32 %v23, 7
  %v25 = vsub.s32 0, %v24
  %v26 = vrot.slane %v22, %v25
  %vm27 = vcmask 130048
  %v29 = vsel %vm27, %v11, 0
  %v32 = vsel %vm27, %v12, 0
  %v35 = vsel %vm27, %v13, 0
  %v38 = vsel %vm27, %v14, 0
  %v41 = vsel %vm27, %v15, 0
  %v44 = vsel %vm27, %v16, 0
  %v47 = vsel %vm27, %v17, 0
  %v50 = vsel %vm27, %v18, 0
  %v53 = vsel %vm27, %v19, 0
  %55 = vmatprep.subr.mxu0 0.0
  %56 = vmatpush1.msra.mxu0 0.0
  %57 = vmatprep.subr.mxu0 0.0
  %58 = vmatpush1.msra.mxu0 0.0
  %59 = vmatprep.subr.mxu0 0.0
  %60 = vmatpush1.msra.mxu0 0.0
  %61 = vmatprep.subr.mxu0 0.0
  %62 = vmatpush1.msra.mxu0 0.0
  %63 = vmatprep.subr.mxu0 0.0
  %64 = vmatpush1.msra.mxu0 0.0
  %65 = vmatprep.subr.mxu0 0.0
  %66 = vmatpush1.msra.mxu0 0.0
  %67 = vmatprep.subr.mxu0 0.0
  %68 = vmatpush1.msra.mxu0 0.0
  %69 = vmatprep.subr.mxu0 0.0
  %70 = vmatpush1.msra.mxu0 0.0
  %71 = vmatprep.subr.mxu0 0.0
  %72 = vmatpush1.msra.mxu0 0.0
  %73 = vmatprep.subr.mxu0 0.0
  %74 = vmatpush1.msra.mxu0 0.0
  %75 = vmatprep.subr.mxu0 0.0
  %76 = vmatpush1.msra.mxu0 0.0
  %77 = vmatprep.subr.mxu0 0.0
  %78 = vmatpush1.msra.mxu0 0.0
  %79 = vmatprep.subr.mxu0 0.0
  %80 = vmatpush1.msra.mxu0 0.0
  %81 = vmatprep.subr.mxu0 0.0
  %82 = vmatpush1.msra.mxu0 0.0
  %83 = vmatprep.subr.mxu0 0.0
  %84 = vmatpush1.msra.mxu0 %v21
  %85 = vmatprep.subr.mxu0 0.0
  %86 = vmatpush1.msra.mxu0 %v20
  %87 = vmatprep.subr.mxu0 0.0
  %88 = vmatpush2.msra.mxu0 0.0
  %89 = vmatprep.subr.mxu0 0.0
  %90 = vmatpush2.msra.mxu0 0.0
  %91 = vmatprep.subr.mxu0 0.0
  %92 = vmatpush2.msra.mxu0 0.0
  %93 = vmatprep.subr.mxu0 0.0
  %94 = vmatpush2.msra.mxu0 0.0
  %95 = vmatprep.subr.mxu0 0.0
  %96 = vmatpush2.msra.mxu0 0.0
  %97 = vmatprep.subr.mxu0 0.0
  %98 = vmatpush2.msra.mxu0 0.0
  %99 = vmatprep.subr.mxu0 0.0
  %100 = vmatpush2.msra.mxu0 0.0
  %101 = vmatprep.subr.mxu0 0.0
  %102 = vmatpush2.msra.mxu0 0.0
  %103 = vmatprep.subr.mxu0 0.0
  %104 = vmatpush2.msra.mxu0 0.0
  %105 = vmatprep.subr.mxu0 0.0
  %106 = vmatpush2.msra.mxu0 0.0
  %107 = vmatprep.subr.mxu0 0.0
  %108 = vmatpush2.msra.mxu0 0.0
  %109 = vmatprep.subr.mxu0 0.0
  %110 = vmatpush2.msra.mxu0 0.0
  %111 = vmatprep.subr.mxu0 0.0
  %112 = vmatpush2.msra.mxu0 0.0
  %113 = vmatprep.subr.mxu0 0.0
  %114 = vmatpush2.msra.mxu0 0.0
  %115 = vmatprep.subr.mxu0 0.0
  %116 = vmatpush2.msra.mxu0 0.0
  %117 = vmatprep.subr.mxu0 0.0
  %118 = vmatpush2.msra.mxu0 0.0
  %119 = vmatprep.mubr.f32.mxu0 0.0
  %120 = vmatmul.mubr.f32.gmra.mxu0 %v29
  %v121 = vpop.f32.mrf.mxu0
  %v122 = vadd.f32 %v26, %v121
  %v123 = vpop.f32.mrf.mxu0
  %124 = vmatprep.mubr.f32.mxu0 0.0
  %125 = vmatmul.mubr.f32.gmra.mxu0 %v32
  %v126 = vpop.f32.mrf.mxu0
  %v127 = vadd.f32 %v26, %v126
  %v128 = vpop.f32.mrf.mxu0
  %129 = vmatprep.mubr.f32.mxu0 0.0
  %130 = vmatmul.mubr.f32.gmra.mxu0 %v35
  %v131 = vpop.f32.mrf.mxu0
  %v132 = vadd.f32 %v26, %v131
  %v133 = vpop.f32.mrf.mxu0
  %134 = vmatprep.mubr.f32.mxu0 0.0
  %135 = vmatmul.mubr.f32.gmra.mxu0 %v38
  %v136 = vpop.f32.mrf.mxu0
  %v137 = vadd.f32 %v26, %v136
  %v138 = vpop.f32.mrf.mxu0
  %139 = vmatprep.mubr.f32.mxu0 0.0
  %140 = vmatmul.mubr.f32.gmra.mxu0 %v41
  %v141 = vpop.f32.mrf.mxu0
  %v142 = vadd.f32 %v26, %v141
  %v143 = vpop.f32.mrf.mxu0
  %144 = vmatprep.mubr.f32.mxu0 0.0
  %145 = vmatmul.mubr.f32.gmra.mxu0 %v44
  %v146 = vpop.f32.mrf.mxu0
  %v147 = vadd.f32 %v26, %v146
  %v148 = vpop.f32.mrf.mxu0
  %149 = vmatprep.mubr.f32.mxu0 0.0
  %150 = vmatmul.mubr.f32.gmra.mxu0 %v47
  %v151 = vpop.f32.mrf.mxu0
  %v152 = vadd.f32 %v26, %v151
  %v153 = vpop.f32.mrf.mxu0
  %154 = vmatprep.mubr.f32.mxu0 0.0
  %155 = vmatmul.mubr.f32.gmra.mxu0 %v50
  %v156 = vpop.f32.mrf.mxu0
  %v157 = vadd.f32 %v26, %v156
  %v158 = vpop.f32.mrf.mxu0
  %159 = vmatprep.mubr.f32.mxu0 0.0
  %160 = vmatmul.mubr.f32.gmra.mxu0 %v53
  %v161 = vpop.f32.mrf.mxu0
  %v162 = vadd.f32 %v26, %v161
  %v163 = vpop.f32.mrf.mxu0
  %164 = vdwg.mxu0
  %v165 = vmax.f32 %v122, 0.0
  %v166 = vmax.f32 %v127, 0.0
  %v167 = vmax.f32 %v132, 0.0
  %v168 = vmax.f32 %v137, 0.0
  %v169 = vmax.f32 %v142, 0.0
  %v170 = vmax.f32 %v147, 0.0
  %v171 = vmax.f32 %v152, 0.0
  %v172 = vmax.f32 %v157, 0.0
  %v173 = vmax.f32 %v162, 0.0
  %vm174 = vcmask 261120
  %v175 = vsel %vm174, %v165, 0.0
  %v176 = vsel %vm174, %v166, 0.0
  %v177 = vadd.f32 %v175, %v176
  %v178 = vsel %vm174, %v167, 0.0
  %v179 = vadd.f32 %v177, %v178
  %v180 = vsel %vm174, %v168, 0.0
  %v181 = vadd.f32 %v179, %v180
  %v182 = vsel %vm174, %v169, 0.0
  %v183 = vadd.f32 %v181, %v182
  %v184 = vsel %vm174, %v170, 0.0
  %v185 = vadd.f32 %v183, %v184
  %v186 = vsel %vm174, %v171, 0.0
  %v187 = vadd.f32 %v185, %v186
  %v188 = vsel %vm174, %v172, 0.0
  %v189 = vadd.f32 %v187, %v188
  %v190 = vsel %vm174, %v173, 0.0
  %v191 = vadd.f32 %v189, %v190
  %v192 = vld [vmem:[%s1 + $0x18] sm:$0xff]
  %v193 = vld [vmem:[%s1 + $0x20] sm:$0xff]
  %v194 = vld [vmem:[%s1 + $0x28] sm:$0xff]
  %v195 = vld [vmem:[%s1 + $0x30] sm:$0xff]
  %v197 = vsel %vm174, %v191, 0
  %199 = vmatprep.subr.mxu0 0.0
  %200 = vmatpush1.msra.mxu0 0.0
  %201 = vmatprep.subr.mxu0 0.0
  %202 = vmatpush1.msra.mxu0 0.0
  %203 = vmatprep.subr.mxu0 0.0
  %204 = vmatpush1.msra.mxu0 0.0
  %205 = vmatprep.subr.mxu0 0.0
  %206 = vmatpush1.msra.mxu0 0.0
  %207 = vmatprep.subr.mxu0 0.0
  %208 = vmatpush1.msra.mxu0 0.0
  %209 = vmatprep.subr.mxu0 0.0
  %210 = vmatpush1.msra.mxu0 0.0
  %211 = vmatprep.subr.mxu0 0.0
  %212 = vmatpush1.msra.mxu0 0.0
  %213 = vmatprep.subr.mxu0 0.0
  %214 = vmatpush1.msra.mxu0 0.0
  %215 = vmatprep.subr.mxu0 0.0
  %216 = vmatpush1.msra.mxu0 0.0
  %217 = vmatprep.subr.mxu0 0.0
  %218 = vmatpush1.msra.mxu0 0.0
  %219 = vmatprep.subr.mxu0 0.0
  %220 = vmatpush1.msra.mxu0 0.0
  %221 = vmatprep.subr.mxu0 0.0
  %222 = vmatpush1.msra.mxu0 0.0
  %223 = vmatprep.subr.mxu0 0.0
  %224 = vmatpush1.msra.mxu0 %v195
  %225 = vmatprep.subr.mxu0 0.0
  %226 = vmatpush1.msra.mxu0 %v194
  %227 = vmatprep.subr.mxu0 0.0
  %228 = vmatpush1.msra.mxu0 %v193
  %229 = vmatprep.subr.mxu0 0.0
  %230 = vmatpush1.msra.mxu0 %v192
  %231 = vmatprep.subr.mxu0 0.0
  %232 = vmatpush2.msra.mxu0 0.0
  %233 = vmatprep.subr.mxu0 0.0
  %234 = vmatpush2.msra.mxu0 0.0
  %235 = vmatprep.subr.mxu0 0.0
  %236 = vmatpush2.msra.mxu0 0.0
  %237 = vmatprep.subr.mxu0 0.0
  %238 = vmatpush2.msra.mxu0 0.0
  %239 = vmatprep.subr.mxu0 0.0
  %240 = vmatpush2.msra.mxu0 0.0
  %241 = vmatprep.subr.mxu0 0.0
  %242 = vmatpush2.msra.mxu0 0.0
  %243 = vmatprep.subr.mxu0 0.0
  %244 = vmatpush2.msra.mxu0 0.0
  %245 = vmatprep.subr.mxu0 0.0
  %246 = vmatpush2.msra.mxu0 0.0
  %247 = vmatprep.subr.mxu0 0.0
  %248 = vmatpush2.msra.mxu0 0.0
  %249 = vmatprep.subr.mxu0 0.0
  %250 = vmatpush2.msra.mxu0 0.0
  %251 = vmatprep.subr.mxu0 0.0
  %252 = vmatpush2.msra.mxu0 0.0
  %253 = vmatprep.subr.mxu0 0.0
  %254 = vmatpush2.msra.mxu0 0.0
  %255 = vmatprep.subr.mxu0 0.0
  %256 = vmatpush2.msra.mxu0 0.0
  %257 = vmatprep.subr.mxu0 0.0
  %258 = vmatpush2.msra.mxu0 0.0
  %259 = vmatprep.subr.mxu0 0.0
  %260 = vmatpush2.msra.mxu0 0.0
  %261 = vmatprep.subr.mxu0 0.0
  %262 = vmatpush2.msra.mxu0 0.0
  %263 = vmatprep.mubr.f32.mxu0 0.0
  %264 = vmatmul.mubr.f32.gmra.mxu0 %v197
  %v265 = vpop.f32.mrf.mxu0
  %v266 = vadd.f32 0.0, %v265
  %v267 = vpop.f32.mrf.mxu0
  %268 = vdwg.mxu0
  %v269 = vmax.f32 %v266, 0.0
  %v270 = vld [vmem:[%s1 + $0x38] sm:$0xff]
  %v271 = vld [vmem:[%s1 + $0x40] sm:$0xff]
  %v272 = vld [vmem:[%s1 + $0x48] sm:$0xff]
  %v273 = vld [vmem:[%s1 + $0x50] sm:$0xff]
  %v275 = vsel %vm174, %v269, 0
  %277 = vmatprep.subr.mxu0 0.0
  %278 = vmatpush1.msra.mxu0 0.0
  %279 = vmatprep.subr.mxu0 0.0
  %280 = vmatpush1.msra.mxu0 0.0
  %281 = vmatprep.subr.mxu0 0.0
  %282 = vmatpush1.msra.mxu0 0.0
  %283 = vmatprep.subr.mxu0 0.0
  %284 = vmatpush1.msra.mxu0 0.0
  %285 = vmatprep.subr.mxu0 0.0
  %286 = vmatpush1.msra.mxu0 0.0
  %287 = vmatprep.subr.mxu0 0.0
  %288 = vmatpush1.msra.mxu0 0.0
  %289 = vmatprep.subr.mxu0 0.0
  %290 = vmatpush1.msra.mxu0 0.0
  %291 = vmatprep.subr.mxu0 0.0
  %292 = vmatpush1.msra.mxu0 0.0
  %293 = vmatprep.subr.mxu0 0.0
  %294 = vmatpush1.msra.mxu0 0.0
  %295 = vmatprep.subr.mxu0 0.0
  %296 = vmatpush1.msra.mxu0 0.0
  %297 = vmatprep.subr.mxu0 0.0
  %298 = vmatpush1.msra.mxu0 0.0
  %299 = vmatprep.subr.mxu0 0.0
  %300 = vmatpush1.msra.mxu0 0.0
  %301 = vmatprep.subr.mxu0 0.0
  %302 = vmatpush1.msra.mxu0 %v273
  %303 = vmatprep.subr.mxu0 0.0
  %304 = vmatpush1.msra.mxu0 %v272
  %305 = vmatprep.subr.mxu0 0.0
  %306 = vmatpush1.msra.mxu0 %v271
  %307 = vmatprep.subr.mxu0 0.0
  %308 = vmatpush1.msra.mxu0 %v270
  %309 = vmatprep.subr.mxu0 0.0
  %310 = vmatpush2.msra.mxu0 0.0
  %311 = vmatprep.subr.mxu0 0.0
  %312 = vmatpush2.msra.mxu0 0.0
  %313 = vmatprep.subr.mxu0 0.0
  %314 = vmatpush2.msra.mxu0 0.0
  %315 = vmatprep.subr.mxu0 0.0
  %316 = vmatpush2.msra.mxu0 0.0
  %317 = vmatprep.subr.mxu0 0.0
  %318 = vmatpush2.msra.mxu0 0.0
  %319 = vmatprep.subr.mxu0 0.0
  %320 = vmatpush2.msra.mxu0 0.0
  %321 = vmatprep.subr.mxu0 0.0
  %322 = vmatpush2.msra.mxu0 0.0
  %323 = vmatprep.subr.mxu0 0.0
  %324 = vmatpush2.msra.mxu0 0.0
  %325 = vmatprep.subr.mxu0 0.0
  %326 = vmatpush2.msra.mxu0 0.0
  %327 = vmatprep.subr.mxu0 0.0
  %328 = vmatpush2.msra.mxu0 0.0
  %329 = vmatprep.subr.mxu0 0.0
  %330 = vmatpush2.msra.mxu0 0.0
  %331 = vmatprep.subr.mxu0 0.0
  %332 = vmatpush2.msra.mxu0 0.0
  %333 = vmatprep.subr.mxu0 0.0
  %334 = vmatpush2.msra.mxu0 0.0
  %335 = vmatprep.subr.mxu0 0.0
  %336 = vmatpush2.msra.mxu0 0.0
  %337 = vmatprep.subr.mxu0 0.0
  %338 = vmatpush2.msra.mxu0 0.0
  %339 = vmatprep.subr.mxu0 0.0
  %340 = vmatpush2.msra.mxu0 0.0
  %341 = vmatprep.mubr.f32.mxu0 0.0
  %342 = vmatmul.mubr.f32.gmra.mxu0 %v275
  %v343 = vpop.f32.mrf.mxu0
  %v344 = vadd.f32 0.0, %v343
  %v345 = vpop.f32.mrf.mxu0
  %346 = vdwg.mxu0
  %v347 = vxor.u32 %v344, 2147483648
  %v348 = vmul.f32 %v347, 1.442695
  %v349 = vpow.pop %v348
  %v350 = vadd.f32 %v349, 1.0
  %v351 = vrcp.pop %v350
  %v352 = vmul.f32 1.0, %v351
  %v353 = vmul.f32 %v165, %v165
  %v354 = vmul.f32 %v166, %v166
  %v355 = vmul.f32 %v167, %v167
  %v356 = vmul.f32 %v168, %v168
  %v357 = vmul.f32 %v169, %v169
  %v358 = vmul.f32 %v170, %v170
  %v359 = vmul.f32 %v171, %v171
  %v360 = vmul.f32 %v172, %v172
  %v361 = vmul.f32 %v173, %v173
  %v362 = vmul.f32 %v353, %v352
  %v363 = vmul.f32 %v354, %v352
  %v364 = vmul.f32 %v355, %v352
  %v365 = vmul.f32 %v356, %v352
  %v366 = vmul.f32 %v357, %v352
  %v367 = vmul.f32 %v358, %v352
  %v368 = vmul.f32 %v359, %v352
  %v369 = vmul.f32 %v360, %v352
  %v370 = vmul.f32 %v361, %v352
  %v371 = vld [vmem:[%s1 + $0x58] sm:$0xff]
  %v372 = vld [vmem:[%s1 + $0x60] sm:$0xff]
  %v373 = vld [vmem:[%s1 + $0x68] sm:$0xff]
  %v374 = vld [vmem:[%s1 + $0x70] sm:$0xff]
  %v375 = vld [vmem:[%s1 + $0x78] sm:$0xff]
  %v376 = vld [vmem:[%s1 + $0x80] sm:$0xff]
  %v377 = vld [vmem:[%s1 + $0x88] sm:$0xff]
  %v378 = vld [vmem:[%s1 + $0x90] sm:$0xff]
  %v380 = vsel %vm174, %v363, 0
  %v383 = vsel %vm174, %v364, 0
  %v386 = vsel %vm174, %v366, 0
  %v389 = vsel %vm174, %v367, 0
  %391 = vmatprep.subr.mxu0 0.0
  %392 = vmatpush1.msra.mxu0 0.0
  %393 = vmatprep.subr.mxu0 0.0
  %394 = vmatpush1.msra.mxu0 0.0
  %395 = vmatprep.subr.mxu0 0.0
  %396 = vmatpush1.msra.mxu0 0.0
  %397 = vmatprep.subr.mxu0 0.0
  %398 = vmatpush1.msra.mxu0 0.0
  %399 = vmatprep.subr.mxu0 0.0
  %400 = vmatpush1.msra.mxu0 0.0
  %401 = vmatprep.subr.mxu0 0.0
  %402 = vmatpush1.msra.mxu0 0.0
  %403 = vmatprep.subr.mxu0 0.0
  %404 = vmatpush1.msra.mxu0 0.0
  %405 = vmatprep.subr.mxu0 0.0
  %406 = vmatpush1.msra.mxu0 0.0
  %407 = vmatprep.subr.mxu0 0.0
  %408 = vmatpush1.msra.mxu0 0.0
  %409 = vmatprep.subr.mxu0 0.0
  %410 = vmatpush1.msra.mxu0 0.0
  %411 = vmatprep.subr.mxu0 0.0
  %412 = vmatpush1.msra.mxu0 0.0
  %413 = vmatprep.subr.mxu0 0.0
  %414 = vmatpush1.msra.mxu0 0.0
  %415 = vmatprep.subr.mxu0 0.0
  %416 = vmatpush1.msra.mxu0 %v378
  %417 = vmatprep.subr.mxu0 0.0
  %418 = vmatpush1.msra.mxu0 %v377
  %419 = vmatprep.subr.mxu0 0.0
  %420 = vmatpush1.msra.mxu0 %v376
  %421 = vmatprep.subr.mxu0 0.0
  %422 = vmatpush1.msra.mxu0 %v375
  %423 = vmatprep.subr.mxu0 0.0
  %424 = vmatpush2.msra.mxu0 0.0
  %425 = vmatprep.subr.mxu0 0.0
  %426 = vmatpush2.msra.mxu0 0.0
  %427 = vmatprep.subr.mxu0 0.0
  %428 = vmatpush2.msra.mxu0 0.0
  %429 = vmatprep.subr.mxu0 0.0
  %430 = vmatpush2.msra.mxu0 0.0
  %431 = vmatprep.subr.mxu0 0.0
  %432 = vmatpush2.msra.mxu0 0.0
  %433 = vmatprep.subr.mxu0 0.0
  %434 = vmatpush2.msra.mxu0 0.0
  %435 = vmatprep.subr.mxu0 0.0
  %436 = vmatpush2.msra.mxu0 0.0
  %437 = vmatprep.subr.mxu0 0.0
  %438 = vmatpush2.msra.mxu0 0.0
  %439 = vmatprep.subr.mxu0 0.0
  %440 = vmatpush2.msra.mxu0 0.0
  %441 = vmatprep.subr.mxu0 0.0
  %442 = vmatpush2.msra.mxu0 0.0
  %443 = vmatprep.subr.mxu0 0.0
  %444 = vmatpush2.msra.mxu0 0.0
  %445 = vmatprep.subr.mxu0 0.0
  %446 = vmatpush2.msra.mxu0 0.0
  %447 = vmatprep.subr.mxu0 0.0
  %448 = vmatpush2.msra.mxu0 0.0
  %449 = vmatprep.subr.mxu0 0.0
  %450 = vmatpush2.msra.mxu0 0.0
  %451 = vmatprep.subr.mxu0 0.0
  %452 = vmatpush2.msra.mxu0 0.0
  %453 = vmatprep.subr.mxu0 0.0
  %454 = vmatpush2.msra.mxu0 0.0
  %455 = vmatprep.mubr.f32.mxu0 0.0
  %456 = vmatmul.mubr.f32.gmra.mxu0 %v380
  %v457 = vpop.f32.mrf.mxu0
  %v458 = vadd.f32 0.0, %v457
  %v459 = vpop.f32.mrf.mxu0
  %460 = vmatprep.mubr.f32.mxu0 0.0
  %461 = vmatmul.mubr.f32.gmra.mxu0 %v383
  %v462 = vpop.f32.mrf.mxu0
  %v463 = vadd.f32 0.0, %v462
  %v464 = vpop.f32.mrf.mxu0
  %465 = vmatprep.mubr.f32.mxu0 0.0
  %466 = vmatmul.mubr.f32.gmra.mxu0 %v386
  %v467 = vpop.f32.mrf.mxu0
  %v468 = vadd.f32 0.0, %v467
  %v469 = vpop.f32.mrf.mxu0
  %470 = vmatprep.mubr.f32.mxu0 0.0
  %471 = vmatmul.mubr.f32.gmra.mxu0 %v389
  %v472 = vpop.f32.mrf.mxu0
  %v473 = vadd.f32 0.0, %v472
  %v474 = vpop.f32.mrf.mxu0
  %475 = vdwg.mxu0
  %v477 = vsel %vm174, %v362, 0
  %v480 = vsel %vm174, %v365, 0
  %482 = vmatprep.subr.mxu0 0.0
  %483 = vmatpush1.msra.mxu0 0.0
  %484 = vmatprep.subr.mxu0 0.0
  %485 = vmatpush1.msra.mxu0 0.0
  %486 = vmatprep.subr.mxu0 0.0
  %487 = vmatpush1.msra.mxu0 0.0
  %488 = vmatprep.subr.mxu0 0.0
  %489 = vmatpush1.msra.mxu0 0.0
  %490 = vmatprep.subr.mxu0 0.0
  %491 = vmatpush1.msra.mxu0 0.0
  %492 = vmatprep.subr.mxu0 0.0
  %493 = vmatpush1.msra.mxu0 0.0
  %494 = vmatprep.subr.mxu0 0.0
  %495 = vmatpush1.msra.mxu0 0.0
  %496 = vmatprep.subr.mxu0 0.0
  %497 = vmatpush1.msra.mxu0 0.0
  %498 = vmatprep.subr.mxu0 0.0
  %499 = vmatpush1.msra.mxu0 0.0
  %500 = vmatprep.subr.mxu0 0.0
  %501 = vmatpush1.msra.mxu0 0.0
  %502 = vmatprep.subr.mxu0 0.0
  %503 = vmatpush1.msra.mxu0 0.0
  %504 = vmatprep.subr.mxu0 0.0
  %505 = vmatpush1.msra.mxu0 0.0
  %506 = vmatprep.subr.mxu0 0.0
  %507 = vmatpush1.msra.mxu0 %v374
  %508 = vmatprep.subr.mxu0 0.0
  %509 = vmatpush1.msra.mxu0 %v373
  %510 = vmatprep.subr.mxu0 0.0
  %511 = vmatpush1.msra.mxu0 %v372
  %512 = vmatprep.subr.mxu0 0.0
  %513 = vmatpush1.msra.mxu0 %v371
  %514 = vmatprep.subr.mxu0 0.0
  %515 = vmatpush2.msra.mxu0 0.0
  %516 = vmatprep.subr.mxu0 0.0
  %517 = vmatpush2.msra.mxu0 0.0
  %518 = vmatprep.subr.mxu0 0.0
  %519 = vmatpush2.msra.mxu0 0.0
  %520 = vmatprep.subr.mxu0 0.0
  %521 = vmatpush2.msra.mxu0 0.0
  %522 = vmatprep.subr.mxu0 0.0
  %523 = vmatpush2.msra.mxu0 0.0
  %524 = vmatprep.subr.mxu0 0.0
  %525 = vmatpush2.msra.mxu0 0.0
  %526 = vmatprep.subr.mxu0 0.0
  %527 = vmatpush2.msra.mxu0 0.0
  %528 = vmatprep.subr.mxu0 0.0
  %529 = vmatpush2.msra.mxu0 0.0
  %530 = vmatprep.subr.mxu0 0.0
  %531 = vmatpush2.msra.mxu0 0.0
  %532 = vmatprep.subr.mxu0 0.0
  %533 = vmatpush2.msra.mxu0 0.0
  %534 = vmatprep.subr.mxu0 0.0
  %535 = vmatpush2.msra.mxu0 0.0
  %536 = vmatprep.subr.mxu0 0.0
  %537 = vmatpush2.msra.mxu0 0.0
  %538 = vmatprep.subr.mxu0 0.0
  %539 = vmatpush2.msra.mxu0 0.0
  %540 = vmatprep.subr.mxu0 0.0
  %541 = vmatpush2.msra.mxu0 0.0
  %542 = vmatprep.subr.mxu0 0.0
  %543 = vmatpush2.msra.mxu0 0.0
  %544 = vmatprep.subr.mxu0 0.0
  %545 = vmatpush2.msra.mxu0 0.0
  %546 = vmatprep.mubr.f32.mxu0 0.0
  %547 = vmatmul.mubr.f32.gmra.mxu0 %v477
  %v548 = vpop.f32.mrf.mxu0
  %v549 = vadd.f32 %v458, %v548
  %v550 = vpop.f32.mrf.mxu0
  %551 = vmatprep.mubr.f32.mxu0 0.0
  %552 = vmatmul.mubr.f32.gmra.mxu0 %v380
  %v553 = vpop.f32.mrf.mxu0
  %v554 = vadd.f32 %v463, %v553
  %v555 = vpop.f32.mrf.mxu0
  %556 = vmatprep.mubr.f32.mxu0 0.0
  %557 = vmatmul.mubr.f32.gmra.mxu0 %v480
  %v558 = vpop.f32.mrf.mxu0
  %v559 = vadd.f32 %v468, %v558
  %v560 = vpop.f32.mrf.mxu0
  %561 = vmatprep.mubr.f32.mxu0 0.0
  %562 = vmatmul.mubr.f32.gmra.mxu0 %v386
  %v563 = vpop.f32.mrf.mxu0
  %v564 = vadd.f32 %v473, %v563
  %v565 = vpop.f32.mrf.mxu0
  %566 = vdwg.mxu0
  %v567 = vld [vmem:[%s1 + $0x98] sm:$0xff]
  %v568 = vld [vmem:[%s1 + $0xa0] sm:$0xff]
  %v569 = vld [vmem:[%s1 + $0xa8] sm:$0xff]
  %v570 = vld [vmem:[%s1 + $0xb0] sm:$0xff]
  %v572 = vsel %vm174, %v368, 0
  %v575 = vsel %vm174, %v369, 0
  %577 = vmatprep.subr.mxu0 0.0
  %578 = vmatpush1.msra.mxu0 0.0
  %579 = vmatprep.subr.mxu0 0.0
  %580 = vmatpush1.msra.mxu0 0.0
  %581 = vmatprep.subr.mxu0 0.0
  %582 = vmatpush1.msra.mxu0 0.0
  %583 = vmatprep.subr.mxu0 0.0
  %584 = vmatpush1.msra.mxu0 0.0
  %585 = vmatprep.subr.mxu0 0.0
  %586 = vmatpush1.msra.mxu0 0.0
  %587 = vmatprep.subr.mxu0 0.0
  %588 = vmatpush1.msra.mxu0 0.0
  %589 = vmatprep.subr.mxu0 0.0
  %590 = vmatpush1.msra.mxu0 0.0
  %591 = vmatprep.subr.mxu0 0.0
  %592 = vmatpush1.msra.mxu0 0.0
  %593 = vmatprep.subr.mxu0 0.0
  %594 = vmatpush1.msra.mxu0 0.0
  %595 = vmatprep.subr.mxu0 0.0
  %596 = vmatpush1.msra.mxu0 0.0
  %597 = vmatprep.subr.mxu0 0.0
  %598 = vmatpush1.msra.mxu0 0.0
  %599 = vmatprep.subr.mxu0 0.0
  %600 = vmatpush1.msra.mxu0 0.0
  %601 = vmatprep.subr.mxu0 0.0
  %602 = vmatpush1.msra.mxu0 %v570
  %603 = vmatprep.subr.mxu0 0.0
  %604 = vmatpush1.msra.mxu0 %v569
  %605 = vmatprep.subr.mxu0 0.0
  %606 = vmatpush1.msra.mxu0 %v568
  %607 = vmatprep.subr.mxu0 0.0
  %608 = vmatpush1.msra.mxu0 %v567
  %609 = vmatprep.subr.mxu0 0.0
  %610 = vmatpush2.msra.mxu0 0.0
  %611 = vmatprep.subr.mxu0 0.0
  %612 = vmatpush2.msra.mxu0 0.0
  %613 = vmatprep.subr.mxu0 0.0
  %614 = vmatpush2.msra.mxu0 0.0
  %615 = vmatprep.subr.mxu0 0.0
  %616 = vmatpush2.msra.mxu0 0.0
  %617 = vmatprep.subr.mxu0 0.0
  %618 = vmatpush2.msra.mxu0 0.0
  %619 = vmatprep.subr.mxu0 0.0
  %620 = vmatpush2.msra.mxu0 0.0
  %621 = vmatprep.subr.mxu0 0.0
  %622 = vmatpush2.msra.mxu0 0.0
  %623 = vmatprep.subr.mxu0 0.0
  %624 = vmatpush2.msra.mxu0 0.0
  %625 = vmatprep.subr.mxu0 0.0
  %626 = vmatpush2.msra.mxu0 0.0
  %627 = vmatprep.subr.mxu0 0.0
  %628 = vmatpush2.msra.mxu0 0.0
  %629 = vmatprep.subr.mxu0 0.0
  %630 = vmatpush2.msra.mxu0 0.0
  %631 = vmatprep.subr.mxu0 0.0
  %632 = vmatpush2.msra.mxu0 0.0
  %633 = vmatprep.subr.mxu0 0.0
  %634 = vmatpush2.msra.mxu0 0.0
  %635 = vmatprep.subr.mxu0 0.0
  %636 = vmatpush2.msra.mxu0 0.0
  %637 = vmatprep.subr.mxu0 0.0
  %638 = vmatpush2.msra.mxu0 0.0
  %639 = vmatprep.subr.mxu0 0.0
  %640 = vmatpush2.msra.mxu0 0.0
  %641 = vmatprep.mubr.f32.mxu0 0.0
  %642 = vmatmul.mubr.f32.gmra.mxu0 %v480
  %v643 = vpop.f32.mrf.mxu0
  %v644 = vadd.f32 0.0, %v643
  %v645 = vpop.f32.mrf.mxu0
  %646 = vmatprep.mubr.f32.mxu0 0.0
  %647 = vmatmul.mubr.f32.gmra.mxu0 %v386
  %v648 = vpop.f32.mrf.mxu0
  %v649 = vadd.f32 0.0, %v648
  %v650 = vpop.f32.mrf.mxu0
  %651 = vmatprep.mubr.f32.mxu0 0.0
  %652 = vmatmul.mubr.f32.gmra.mxu0 %v572
  %v653 = vpop.f32.mrf.mxu0
  %v654 = vadd.f32 0.0, %v653
  %v655 = vpop.f32.mrf.mxu0
  %656 = vmatprep.mubr.f32.mxu0 0.0
  %657 = vmatmul.mubr.f32.gmra.mxu0 %v575
  %v658 = vpop.f32.mrf.mxu0
  %v659 = vadd.f32 0.0, %v658
  %v660 = vpop.f32.mrf.mxu0
  %661 = vdwg.mxu0
  %v662 = vadd.f32 %v549, %v644
  %v663 = vadd.f32 %v554, %v649
  %v664 = vadd.f32 %v559, %v654
  %v665 = vadd.f32 %v564, %v659
  %v666 = vld [vmem:[%s1 + $0xb8] sm:$0xff]
  %v667 = vld [vmem:[%s1 + $0xc0] sm:$0xff]
  %v668 = vld [vmem:[%s1 + $0xc8] sm:$0xff]
  %v669 = vld [vmem:[%s1 + $0xd0] sm:$0xff]
  %v671 = vsel %vm174, %v370, 0
  %673 = vmatprep.subr.mxu0 0.0
  %674 = vmatpush1.msra.mxu0 0.0
  %675 = vmatprep.subr.mxu0 0.0
  %676 = vmatpush1.msra.mxu0 0.0
  %677 = vmatprep.subr.mxu0 0.0
  %678 = vmatpush1.msra.mxu0 0.0
  %679 = vmatprep.subr.mxu0 0.0
  %680 = vmatpush1.msra.mxu0 0.0
  %681 = vmatprep.subr.mxu0 0.0
  %682 = vmatpush1.msra.mxu0 0.0
  %683 = vmatprep.subr.mxu0 0.0
  %684 = vmatpush1.msra.mxu0 0.0
  %685 = vmatprep.subr.mxu0 0.0
  %686 = vmatpush1.msra.mxu0 0.0
  %687 = vmatprep.subr.mxu0 0.0
  %688 = vmatpush1.msra.mxu0 0.0
  %689 = vmatprep.subr.mxu0 0.0
  %690 = vmatpush1.msra.mxu0 0.0
  %691 = vmatprep.subr.mxu0 0.0
  %692 = vmatpush1.msra.mxu0 0.0
  %693 = vmatprep.subr.mxu0 0.0
  %694 = vmatpush1.msra.mxu0 0.0
  %695 = vmatprep.subr.mxu0 0.0
  %696 = vmatpush1.msra.mxu0 0.0
  %697 = vmatprep.subr.mxu0 0.0
  %698 = vmatpush1.msra.mxu0 %v669
  %699 = vmatprep.subr.mxu0 0.0
  %700 = vmatpush1.msra.mxu0 %v668
  %701 = vmatprep.subr.mxu0 0.0
  %702 = vmatpush1.msra.mxu0 %v667
  %703 = vmatprep.subr.mxu0 0.0
  %704 = vmatpush1.msra.mxu0 %v666
  %705 = vmatprep.subr.mxu0 0.0
  %706 = vmatpush2.msra.mxu0 0.0
  %707 = vmatprep.subr.mxu0 0.0
  %708 = vmatpush2.msra.mxu0 0.0
  %709 = vmatprep.subr.mxu0 0.0
  %710 = vmatpush2.msra.mxu0 0.0
  %711 = vmatprep.subr.mxu0 0.0
  %712 = vmatpush2.msra.mxu0 0.0
  %713 = vmatprep.subr.mxu0 0.0
  %714 = vmatpush2.msra.mxu0 0.0
  %715 = vmatprep.subr.mxu0 0.0
  %716 = vmatpush2.msra.mxu0 0.0
  %717 = vmatprep.subr.mxu0 0.0
  %718 = vmatpush2.msra.mxu0 0.0
  %719 = vmatprep.subr.mxu0 0.0
  %720 = vmatpush2.msra.mxu0 0.0
  %721 = vmatprep.subr.mxu0 0.0
  %722 = vmatpush2.msra.mxu0 0.0
  %723 = vmatprep.subr.mxu0 0.0
  %724 = vmatpush2.msra.mxu0 0.0
  %725 = vmatprep.subr.mxu0 0.0
  %726 = vmatpush2.msra.mxu0 0.0
  %727 = vmatprep.subr.mxu0 0.0
  %728 = vmatpush2.msra.mxu0 0.0
  %729 = vmatprep.subr.mxu0 0.0
  %730 = vmatpush2.msra.mxu0 0.0
  %731 = vmatprep.subr.mxu0 0.0
  %732 = vmatpush2.msra.mxu0 0.0
  %733 = vmatprep.subr.mxu0 0.0
  %734 = vmatpush2.msra.mxu0 0.0
  %735 = vmatprep.subr.mxu0 0.0
  %736 = vmatpush2.msra.mxu0 0.0
  %737 = vmatprep.mubr.f32.mxu0 0.0
  %738 = vmatmul.mubr.f32.gmra.mxu0 %v386
  %v739 = vpop.f32.mrf.mxu0
  %v740 = vadd.f32 0.0, %v739
  %v741 = vpop.f32.mrf.mxu0
  %742 = vmatprep.mubr.f32.mxu0 0.0
  %743 = vmatmul.mubr.f32.gmra.mxu0 %v389
  %v744 = vpop.f32.mrf.mxu0
  %v745 = vadd.f32 0.0, %v744
  %v746 = vpop.f32.mrf.mxu0
  %747 = vmatprep.mubr.f32.mxu0 0.0
  %748 = vmatmul.mubr.f32.gmra.mxu0 %v575
  %v749 = vpop.f32.mrf.mxu0
  %v750 = vadd.f32 0.0, %v749
  %v751 = vpop.f32.mrf.mxu0
  %752 = vmatprep.mubr.f32.mxu0 0.0
  %753 = vmatmul.mubr.f32.gmra.mxu0 %v671
  %v754 = vpop.f32.mrf.mxu0
  %v755 = vadd.f32 0.0, %v754
  %v756 = vpop.f32.mrf.mxu0
  %757 = vdwg.mxu0
  %v758 = vadd.f32 %v662, %v740
  %v759 = vadd.f32 %v663, %v745
  %v760 = vadd.f32 %v664, %v750
  %v761 = vadd.f32 %v665, %v755
  %v762 = vld [vmem:[%s1 + $0xd8] sm:$0x1]
  %v763 = vlaneseq
  %v764 = vshrl.u32 %v763, 7
  %v765 = vsub.s32 0, %v764
  %v766 = vrot.slane %v762, %v765
  %v767 = vadd.f32 %v758, %v766
  %v768 = vadd.f32 %v759, %v766
  %v769 = vadd.f32 %v760, %v766
  %v770 = vadd.f32 %v761, %v766
  %v771 = vmax.f32 %v767, 0.0
  %v772 = vmax.f32 %v768, 0.0
  %v773 = vmax.f32 %v769, 0.0
  %v774 = vmax.f32 %v770, 0.0
  %vm775 = vcmask 523264
  %v776 = vsel %vm775, %v771, 0.0
  %v777 = vsel %vm775, %v772, 0.0
  %v778 = vadd.f32 %v776, %v777
  %v779 = vsel %vm775, %v773, 0.0
  %v780 = vadd.f32 %v778, %v779
  %v781 = vsel %vm775, %v774, 0.0
  %v782 = vadd.f32 %v780, %v781
  %v783 = vld [vmem:[%s1 + $0xe0] sm:$0xff]
  %v784 = vld [vmem:[%s1 + $0xe8] sm:$0xff]
  %v785 = vld [vmem:[%s1 + $0xf0] sm:$0xff]
  %v786 = vld [vmem:[%s1 + $0xf8] sm:$0xff]
  %v787 = vld [vmem:[%s1 + $0x100] sm:$0xff]
  %v788 = vld [vmem:[%s1 + $0x108] sm:$0xff]
  %v789 = vld [vmem:[%s1 + $0x110] sm:$0xff]
  %v790 = vld [vmem:[%s1 + $0x118] sm:$0xff]
  %v792 = vsel %vm775, %v782, 0
  %794 = vmatprep.subr.mxu0 0.0
  %795 = vmatpush1.msra.mxu0 0.0
  %796 = vmatprep.subr.mxu0 0.0
  %797 = vmatpush1.msra.mxu0 0.0
  %798 = vmatprep.subr.mxu0 0.0
  %799 = vmatpush1.msra.mxu0 0.0
  %800 = vmatprep.subr.mxu0 0.0
  %801 = vmatpush1.msra.mxu0 0.0
  %802 = vmatprep.subr.mxu0 0.0
  %803 = vmatpush1.msra.mxu0 0.0
  %804 = vmatprep.subr.mxu0 0.0
  %805 = vmatpush1.msra.mxu0 0.0
  %806 = vmatprep.subr.mxu0 0.0
  %807 = vmatpush1.msra.mxu0 0.0
  %808 = vmatprep.subr.mxu0 0.0
  %809 = vmatpush1.msra.mxu0 0.0
  %810 = vmatprep.subr.mxu0 0.0
  %811 = vmatpush1.msra.mxu0 %v790
  %812 = vmatprep.subr.mxu0 0.0
  %813 = vmatpush1.msra.mxu0 %v789
  %814 = vmatprep.subr.mxu0 0.0
  %815 = vmatpush1.msra.mxu0 %v788
  %816 = vmatprep.subr.mxu0 0.0
  %817 = vmatpush1.msra.mxu0 %v787
  %818 = vmatprep.subr.mxu0 0.0
  %819 = vmatpush1.msra.mxu0 %v786
  %820 = vmatprep.subr.mxu0 0.0
  %821 = vmatpush1.msra.mxu0 %v785
  %822 = vmatprep.subr.mxu0 0.0
  %823 = vmatpush1.msra.mxu0 %v784
  %824 = vmatprep.subr.mxu0 0.0
  %825 = vmatpush1.msra.mxu0 %v783
  %826 = vmatprep.subr.mxu0 0.0
  %827 = vmatpush2.msra.mxu0 0.0
  %828 = vmatprep.subr.mxu0 0.0
  %829 = vmatpush2.msra.mxu0 0.0
  %830 = vmatprep.subr.mxu0 0.0
  %831 = vmatpush2.msra.mxu0 0.0
  %832 = vmatprep.subr.mxu0 0.0
  %833 = vmatpush2.msra.mxu0 0.0
  %834 = vmatprep.subr.mxu0 0.0
  %835 = vmatpush2.msra.mxu0 0.0
  %836 = vmatprep.subr.mxu0 0.0
  %837 = vmatpush2.msra.mxu0 0.0
  %838 = vmatprep.subr.mxu0 0.0
  %839 = vmatpush2.msra.mxu0 0.0
  %840 = vmatprep.subr.mxu0 0.0
  %841 = vmatpush2.msra.mxu0 0.0
  %842 = vmatprep.subr.mxu0 0.0
  %843 = vmatpush2.msra.mxu0 0.0
  %844 = vmatprep.subr.mxu0 0.0
  %845 = vmatpush2.msra.mxu0 0.0
  %846 = vmatprep.subr.mxu0 0.0
  %847 = vmatpush2.msra.mxu0 0.0
  %848 = vmatprep.subr.mxu0 0.0
  %849 = vmatpush2.msra.mxu0 0.0
  %850 = vmatprep.subr.mxu0 0.0
  %851 = vmatpush2.msra.mxu0 0.0
  %852 = vmatprep.subr.mxu0 0.0
  %853 = vmatpush2.msra.mxu0 0.0
  %854 = vmatprep.subr.mxu0 0.0
  %855 = vmatpush2.msra.mxu0 0.0
  %856 = vmatprep.subr.mxu0 0.0
  %857 = vmatpush2.msra.mxu0 0.0
  %858 = vmatprep.mubr.f32.mxu0 0.0
  %859 = vmatmul.mubr.f32.gmra.mxu0 %v792
  %v860 = vpop.f32.mrf.mxu0
  %v861 = vadd.f32 0.0, %v860
  %v862 = vpop.f32.mrf.mxu0
  %863 = vdwg.mxu0
  %v864 = vmax.f32 %v861, 0.0
  %v865 = vld [vmem:[%s1 + $0x120] sm:$0xff]
  %v866 = vld [vmem:[%s1 + $0x128] sm:$0xff]
  %v867 = vld [vmem:[%s1 + $0x130] sm:$0xff]
  %v868 = vld [vmem:[%s1 + $0x138] sm:$0xff]
  %v869 = vld [vmem:[%s1 + $0x140] sm:$0xff]
  %v870 = vld [vmem:[%s1 + $0x148] sm:$0xff]
  %v871 = vld [vmem:[%s1 + $0x150] sm:$0xff]
  %v872 = vld [vmem:[%s1 + $0x158] sm:$0xff]
  %v874 = vsel %vm775, %v864, 0
  %876 = vmatprep.subr.mxu0 0.0
  %877 = vmatpush1.msra.mxu0 0.0
  %878 = vmatprep.subr.mxu0 0.0
  %879 = vmatpush1.msra.mxu0 0.0
  %880 = vmatprep.subr.mxu0 0.0
  %881 = vmatpush1.msra.mxu0 0.0
  %882 = vmatprep.subr.mxu0 0.0
  %883 = vmatpush1.msra.mxu0 0.0
  %884 = vmatprep.subr.mxu0 0.0
  %885 = vmatpush1.msra.mxu0 0.0
  %886 = vmatprep.subr.mxu0 0.0
  %887 = vmatpush1.msra.mxu0 0.0
  %888 = vmatprep.subr.mxu0 0.0
  %889 = vmatpush1.msra.mxu0 0.0
  %890 = vmatprep.subr.mxu0 0.0
  %891 = vmatpush1.msra.mxu0 0.0
  %892 = vmatprep.subr.mxu0 0.0
  %893 = vmatpush1.msra.mxu0 %v872
  %894 = vmatprep.subr.mxu0 0.0
  %895 = vmatpush1.msra.mxu0 %v871
  %896 = vmatprep.subr.mxu0 0.0
  %897 = vmatpush1.msra.mxu0 %v870
  %898 = vmatprep.subr.mxu0 0.0
  %899 = vmatpush1.msra.mxu0 %v869
  %900 = vmatprep.subr.mxu0 0.0
  %901 = vmatpush1.msra.mxu0 %v868
  %902 = vmatprep.subr.mxu0 0.0
  %903 = vmatpush1.msra.mxu0 %v867
  %904 = vmatprep.subr.mxu0 0.0
  %905 = vmatpush1.msra.mxu0 %v866
  %906 = vmatprep.subr.mxu0 0.0
  %907 = vmatpush1.msra.mxu0 %v865
  %908 = vmatprep.subr.mxu0 0.0
  %909 = vmatpush2.msra.mxu0 0.0
  %910 = vmatprep.subr.mxu0 0.0
  %911 = vmatpush2.msra.mxu0 0.0
  %912 = vmatprep.subr.mxu0 0.0
  %913 = vmatpush2.msra.mxu0 0.0
  %914 = vmatprep.subr.mxu0 0.0
  %915 = vmatpush2.msra.mxu0 0.0
  %916 = vmatprep.subr.mxu0 0.0
  %917 = vmatpush2.msra.mxu0 0.0
  %918 = vmatprep.subr.mxu0 0.0
  %919 = vmatpush2.msra.mxu0 0.0
  %920 = vmatprep.subr.mxu0 0.0
  %921 = vmatpush2.msra.mxu0 0.0
  %922 = vmatprep.subr.mxu0 0.0
  %923 = vmatpush2.msra.mxu0 0.0
  %924 = vmatprep.subr.mxu0 0.0
  %925 = vmatpush2.msra.mxu0 0.0
  %926 = vmatprep.subr.mxu0 0.0
  %927 = vmatpush2.msra.mxu0 0.0
  %928 = vmatprep.subr.mxu0 0.0
  %929 = vmatpush2.msra.mxu0 0.0
  %930 = vmatprep.subr.mxu0 0.0
  %931 = vmatpush2.msra.mxu0 0.0
  %932 = vmatprep.subr.mxu0 0.0
  %933 = vmatpush2.msra.mxu0 0.0
  %934 = vmatprep.subr.mxu0 0.0
  %935 = vmatpush2.msra.mxu0 0.0
  %936 = vmatprep.subr.mxu0 0.0
  %937 = vmatpush2.msra.mxu0 0.0
  %938 = vmatprep.subr.mxu0 0.0
  %939 = vmatpush2.msra.mxu0 0.0
  %940 = vmatprep.mubr.f32.mxu0 0.0
  %941 = vmatmul.mubr.f32.gmra.mxu0 %v874
  %v942 = vpop.f32.mrf.mxu0
  %v943 = vadd.f32 0.0, %v942
  %v944 = vpop.f32.mrf.mxu0
  %945 = vdwg.mxu0
  %v946 = vxor.u32 %v943, 2147483648
  %v947 = vmul.f32 %v946, 1.442695
  %v948 = vpow.pop %v947
  %v949 = vadd.f32 %v948, 1.0
  %v950 = vrcp.pop %v949
  %v951 = vmul.f32 1.0, %v950
  %v952 = vmul.f32 %v771, %v771
  %v953 = vmul.f32 %v772, %v772
  %v954 = vmul.f32 %v773, %v773
  %v955 = vmul.f32 %v774, %v774
  %v956 = vmul.f32 %v952, %v951
  %v957 = vmul.f32 %v953, %v951
  %v958 = vmul.f32 %v954, %v951
  %v959 = vmul.f32 %v955, %v951
  %v960 = vld [vmem:[%s1 + $0x160] sm:$0xff]
  %v961 = vld [vmem:[%s1 + $0x168] sm:$0xff]
  %v962 = vld [vmem:[%s1 + $0x170] sm:$0xff]
  %v963 = vld [vmem:[%s1 + $0x178] sm:$0xff]
  %v964 = vld [vmem:[%s1 + $0x180] sm:$0xff]
  %v965 = vld [vmem:[%s1 + $0x188] sm:$0xff]
  %v966 = vld [vmem:[%s1 + $0x190] sm:$0xff]
  %v967 = vld [vmem:[%s1 + $0x198] sm:$0xff]
  %v968 = vld [vmem:[%s1 + $0x1a0] sm:$0xff]
  %v969 = vld [vmem:[%s1 + $0x1a8] sm:$0xff]
  %v970 = vld [vmem:[%s1 + $0x1b0] sm:$0xff]
  %v971 = vld [vmem:[%s1 + $0x1b8] sm:$0xff]
  %v972 = vld [vmem:[%s1 + $0x1c0] sm:$0xff]
  %v973 = vld [vmem:[%s1 + $0x1c8] sm:$0xff]
  %v974 = vld [vmem:[%s1 + $0x1d0] sm:$0xff]
  %v975 = vld [vmem:[%s1 + $0x1d8] sm:$0xff]
  %v977 = vsel %vm775, %v957, 0
  %979 = vmatprep.subr.mxu0 0.0
  %980 = vmatpush1.msra.mxu0 0.0
  %981 = vmatprep.subr.mxu0 0.0
  %982 = vmatpush1.msra.mxu0 0.0
  %983 = vmatprep.subr.mxu0 0.0
  %984 = vmatpush1.msra.mxu0 0.0
  %985 = vmatprep.subr.mxu0 0.0
  %986 = vmatpush1.msra.mxu0 0.0
  %987 = vmatprep.subr.mxu0 0.0
  %988 = vmatpush1.msra.mxu0 0.0
  %989 = vmatprep.subr.mxu0 0.0
  %990 = vmatpush1.msra.mxu0 0.0
  %991 = vmatprep.subr.mxu0 0.0
  %992 = vmatpush1.msra.mxu0 0.0
  %993 = vmatprep.subr.mxu0 0.0
  %994 = vmatpush1.msra.mxu0 0.0
  %995 = vmatprep.subr.mxu0 0.0
  %996 = vmatpush1.msra.mxu0 %v975
  %997 = vmatprep.subr.mxu0 0.0
  %998 = vmatpush1.msra.mxu0 %v974
  %999 = vmatprep.subr.mxu0 0.0
  %1000 = vmatpush1.msra.mxu0 %v973
  %1001 = vmatprep.subr.mxu0 0.0
  %1002 = vmatpush1.msra.mxu0 %v972
  %1003 = vmatprep.subr.mxu0 0.0
  %1004 = vmatpush1.msra.mxu0 %v971
  %1005 = vmatprep.subr.mxu0 0.0
  %1006 = vmatpush1.msra.mxu0 %v970
  %1007 = vmatprep.subr.mxu0 0.0
  %1008 = vmatpush1.msra.mxu0 %v969
  %1009 = vmatprep.subr.mxu0 0.0
  %1010 = vmatpush1.msra.mxu0 %v968
  %1011 = vmatprep.subr.mxu0 0.0
  %1012 = vmatpush2.msra.mxu0 0.0
  %1013 = vmatprep.subr.mxu0 0.0
  %1014 = vmatpush2.msra.mxu0 0.0
  %1015 = vmatprep.subr.mxu0 0.0
  %1016 = vmatpush2.msra.mxu0 0.0
  %1017 = vmatprep.subr.mxu0 0.0
  %1018 = vmatpush2.msra.mxu0 0.0
  %1019 = vmatprep.subr.mxu0 0.0
  %1020 = vmatpush2.msra.mxu0 0.0
  %1021 = vmatprep.subr.mxu0 0.0
  %1022 = vmatpush2.msra.mxu0 0.0
  %1023 = vmatprep.subr.mxu0 0.0
  %1024 = vmatpush2.msra.mxu0 0.0
  %1025 = vmatprep.subr.mxu0 0.0
  %1026 = vmatpush2.msra.mxu0 0.0
  %1027 = vmatprep.subr.mxu0 0.0
  %1028 = vmatpush2.msra.mxu0 0.0
  %1029 = vmatprep.subr.mxu0 0.0
  %1030 = vmatpush2.msra.mxu0 0.0
  %1031 = vmatprep.subr.mxu0 0.0
  %1032 = vmatpush2.msra.mxu0 0.0
  %1033 = vmatprep.subr.mxu0 0.0
  %1034 = vmatpush2.msra.mxu0 0.0
  %1035 = vmatprep.subr.mxu0 0.0
  %1036 = vmatpush2.msra.mxu0 0.0
  %1037 = vmatprep.subr.mxu0 0.0
  %1038 = vmatpush2.msra.mxu0 0.0
  %1039 = vmatprep.subr.mxu0 0.0
  %1040 = vmatpush2.msra.mxu0 0.0
  %1041 = vmatprep.subr.mxu0 0.0
  %1042 = vmatpush2.msra.mxu0 0.0
  %1043 = vmatprep.mubr.f32.mxu0 0.0
  %1044 = vmatmul.mubr.f32.gmra.mxu0 %v977
  %v1045 = vpop.f32.mrf.mxu0
  %v1046 = vadd.f32 0.0, %v1045
  %v1047 = vpop.f32.mrf.mxu0
  %1048 = vdwg.mxu0
  %v1050 = vsel %vm775, %v956, 0
  %1052 = vmatprep.subr.mxu0 0.0
  %1053 = vmatpush1.msra.mxu0 0.0
  %1054 = vmatprep.subr.mxu0 0.0
  %1055 = vmatpush1.msra.mxu0 0.0
  %1056 = vmatprep.subr.mxu0 0.0
  %1057 = vmatpush1.msra.mxu0 0.0
  %1058 = vmatprep.subr.mxu0 0.0
  %1059 = vmatpush1.msra.mxu0 0.0
  %1060 = vmatprep.subr.mxu0 0.0
  %1061 = vmatpush1.msra.mxu0 0.0
  %1062 = vmatprep.subr.mxu0 0.0
  %1063 = vmatpush1.msra.mxu0 0.0
  %1064 = vmatprep.subr.mxu0 0.0
  %1065 = vmatpush1.msra.mxu0 0.0
  %1066 = vmatprep.subr.mxu0 0.0
  %1067 = vmatpush1.msra.mxu0 0.0
  %1068 = vmatprep.subr.mxu0 0.0
  %1069 = vmatpush1.msra.mxu0 %v967
  %1070 = vmatprep.subr.mxu0 0.0
  %1071 = vmatpush1.msra.mxu0 %v966
  %1072 = vmatprep.subr.mxu0 0.0
  %1073 = vmatpush1.msra.mxu0 %v965
  %1074 = vmatprep.subr.mxu0 0.0
  %1075 = vmatpush1.msra.mxu0 %v964
  %1076 = vmatprep.subr.mxu0 0.0
  %1077 = vmatpush1.msra.mxu0 %v963
  %1078 = vmatprep.subr.mxu0 0.0
  %1079 = vmatpush1.msra.mxu0 %v962
  %1080 = vmatprep.subr.mxu0 0.0
  %1081 = vmatpush1.msra.mxu0 %v961
  %1082 = vmatprep.subr.mxu0 0.0
  %1083 = vmatpush1.msra.mxu0 %v960
  %1084 = vmatprep.subr.mxu0 0.0
  %1085 = vmatpush2.msra.mxu0 0.0
  %1086 = vmatprep.subr.mxu0 0.0
  %1087 = vmatpush2.msra.mxu0 0.0
  %1088 = vmatprep.subr.mxu0 0.0
  %1089 = vmatpush2.msra.mxu0 0.0
  %1090 = vmatprep.subr.mxu0 0.0
  %1091 = vmatpush2.msra.mxu0 0.0
  %1092 = vmatprep.subr.mxu0 0.0
  %1093 = vmatpush2.msra.mxu0 0.0
  %1094 = vmatprep.subr.mxu0 0.0
  %1095 = vmatpush2.msra.mxu0 0.0
  %1096 = vmatprep.subr.mxu0 0.0
  %1097 = vmatpush2.msra.mxu0 0.0
  %1098 = vmatprep.subr.mxu0 0.0
  %1099 = vmatpush2.msra.mxu0 0.0
  %1100 = vmatprep.subr.mxu0 0.0
  %1101 = vmatpush2.msra.mxu0 0.0
  %1102 = vmatprep.subr.mxu0 0.0
  %1103 = vmatpush2.msra.mxu0 0.0
  %1104 = vmatprep.subr.mxu0 0.0
  %1105 = vmatpush2.msra.mxu0 0.0
  %1106 = vmatprep.subr.mxu0 0.0
  %1107 = vmatpush2.msra.mxu0 0.0
  %1108 = vmatprep.subr.mxu0 0.0
  %1109 = vmatpush2.msra.mxu0 0.0
  %1110 = vmatprep.subr.mxu0 0.0
  %1111 = vmatpush2.msra.mxu0 0.0
  %1112 = vmatprep.subr.mxu0 0.0
  %1113 = vmatpush2.msra.mxu0 0.0
  %1114 = vmatprep.subr.mxu0 0.0
  %1115 = vmatpush2.msra.mxu0 0.0
  %1116 = vmatprep.mubr.f32.mxu0 0.0
  %1117 = vmatmul.mubr.f32.gmra.mxu0 %v1050
  %v1118 = vpop.f32.mrf.mxu0
  %v1119 = vadd.f32 %v1046, %v1118
  %v1120 = vpop.f32.mrf.mxu0
  %1121 = vdwg.mxu0
  %v1122 = vld [vmem:[%s1 + $0x1e0] sm:$0xff]
  %v1123 = vld [vmem:[%s1 + $0x1e8] sm:$0xff]
  %v1124 = vld [vmem:[%s1 + $0x1f0] sm:$0xff]
  %v1125 = vld [vmem:[%s1 + $0x1f8] sm:$0xff]
  %v1126 = vld [vmem:[%s1 + $0x200] sm:$0xff]
  %v1127 = vld [vmem:[%s1 + $0x208] sm:$0xff]
  %v1128 = vld [vmem:[%s1 + $0x210] sm:$0xff]
  %v1129 = vld [vmem:[%s1 + $0x218] sm:$0xff]
  %v1131 = vsel %vm775, %v958, 0
  %1133 = vmatprep.subr.mxu0 0.0
  %1134 = vmatpush1.msra.mxu0 0.0
  %1135 = vmatprep.subr.mxu0 0.0
  %1136 = vmatpush1.msra.mxu0 0.0
  %1137 = vmatprep.subr.mxu0 0.0
  %1138 = vmatpush1.msra.mxu0 0.0
  %1139 = vmatprep.subr.mxu0 0.0
  %1140 = vmatpush1.msra.mxu0 0.0
  %1141 = vmatprep.subr.mxu0 0.0
  %1142 = vmatpush1.msra.mxu0 0.0
  %1143 = vmatprep.subr.mxu0 0.0
  %1144 = vmatpush1.msra.mxu0 0.0
  %1145 = vmatprep.subr.mxu0 0.0
  %1146 = vmatpush1.msra.mxu0 0.0
  %1147 = vmatprep.subr.mxu0 0.0
  %1148 = vmatpush1.msra.mxu0 0.0
  %1149 = vmatprep.subr.mxu0 0.0
  %1150 = vmatpush1.msra.mxu0 %v1129
  %1151 = vmatprep.subr.mxu0 0.0
  %1152 = vmatpush1.msra.mxu0 %v1128
  %1153 = vmatprep.subr.mxu0 0.0
  %1154 = vmatpush1.msra.mxu0 %v1127
  %1155 = vmatprep.subr.mxu0 0.0
  %1156 = vmatpush1.msra.mxu0 %v1126
  %1157 = vmatprep.subr.mxu0 0.0
  %1158 = vmatpush1.msra.mxu0 %v1125
  %1159 = vmatprep.subr.mxu0 0.0
  %1160 = vmatpush1.msra.mxu0 %v1124
  %1161 = vmatprep.subr.mxu0 0.0
  %1162 = vmatpush1.msra.mxu0 %v1123
  %1163 = vmatprep.subr.mxu0 0.0
  %1164 = vmatpush1.msra.mxu0 %v1122
  %1165 = vmatprep.subr.mxu0 0.0
  %1166 = vmatpush2.msra.mxu0 0.0
  %1167 = vmatprep.subr.mxu0 0.0
  %1168 = vmatpush2.msra.mxu0 0.0
  %1169 = vmatprep.subr.mxu0 0.0
  %1170 = vmatpush2.msra.mxu0 0.0
  %1171 = vmatprep.subr.mxu0 0.0
  %1172 = vmatpush2.msra.mxu0 0.0
  %1173 = vmatprep.subr.mxu0 0.0
  %1174 = vmatpush2.msra.mxu0 0.0
  %1175 = vmatprep.subr.mxu0 0.0
  %1176 = vmatpush2.msra.mxu0 0.0
  %1177 = vmatprep.subr.mxu0 0.0
  %1178 = vmatpush2.msra.mxu0 0.0
  %1179 = vmatprep.subr.mxu0 0.0
  %1180 = vmatpush2.msra.mxu0 0.0
  %1181 = vmatprep.subr.mxu0 0.0
  %1182 = vmatpush2.msra.mxu0 0.0
  %1183 = vmatprep.subr.mxu0 0.0
  %1184 = vmatpush2.msra.mxu0 0.0
  %1185 = vmatprep.subr.mxu0 0.0
  %1186 = vmatpush2.msra.mxu0 0.0
  %1187 = vmatprep.subr.mxu0 0.0
  %1188 = vmatpush2.msra.mxu0 0.0
  %1189 = vmatprep.subr.mxu0 0.0
  %1190 = vmatpush2.msra.mxu0 0.0
  %1191 = vmatprep.subr.mxu0 0.0
  %1192 = vmatpush2.msra.mxu0 0.0
  %1193 = vmatprep.subr.mxu0 0.0
  %1194 = vmatpush2.msra.mxu0 0.0
  %1195 = vmatprep.subr.mxu0 0.0
  %1196 = vmatpush2.msra.mxu0 0.0
  %1197 = vmatprep.mubr.f32.mxu0 0.0
  %1198 = vmatmul.mubr.f32.gmra.mxu0 %v1131
  %v1199 = vpop.f32.mrf.mxu0
  %v1200 = vadd.f32 0.0, %v1199
  %v1201 = vpop.f32.mrf.mxu0
  %1202 = vdwg.mxu0
  %v1203 = vadd.f32 %v1119, %v1200
  %v1204 = vld [vmem:[%s1 + $0x220] sm:$0xff]
  %v1205 = vld [vmem:[%s1 + $0x228] sm:$0xff]
  %v1206 = vld [vmem:[%s1 + $0x230] sm:$0xff]
  %v1207 = vld [vmem:[%s1 + $0x238] sm:$0xff]
  %v1208 = vld [vmem:[%s1 + $0x240] sm:$0xff]
  %v1209 = vld [vmem:[%s1 + $0x248] sm:$0xff]
  %v1210 = vld [vmem:[%s1 + $0x250] sm:$0xff]
  %v1211 = vld [vmem:[%s1 + $0x258] sm:$0xff]
  %v1213 = vsel %vm775, %v959, 0
  %1215 = vmatprep.subr.mxu0 0.0
  %1216 = vmatpush1.msra.mxu0 0.0
  %1217 = vmatprep.subr.mxu0 0.0
  %1218 = vmatpush1.msra.mxu0 0.0
  %1219 = vmatprep.subr.mxu0 0.0
  %1220 = vmatpush1.msra.mxu0 0.0
  %1221 = vmatprep.subr.mxu0 0.0
  %1222 = vmatpush1.msra.mxu0 0.0
  %1223 = vmatprep.subr.mxu0 0.0
  %1224 = vmatpush1.msra.mxu0 0.0
  %1225 = vmatprep.subr.mxu0 0.0
  %1226 = vmatpush1.msra.mxu0 0.0
  %1227 = vmatprep.subr.mxu0 0.0
  %1228 = vmatpush1.msra.mxu0 0.0
  %1229 = vmatprep.subr.mxu0 0.0
  %1230 = vmatpush1.msra.mxu0 0.0
  %1231 = vmatprep.subr.mxu0 0.0
  %1232 = vmatpush1.msra.mxu0 %v1211
  %1233 = vmatprep.subr.mxu0 0.0
  %1234 = vmatpush1.msra.mxu0 %v1210
  %1235 = vmatprep.subr.mxu0 0.0
  %1236 = vmatpush1.msra.mxu0 %v1209
  %1237 = vmatprep.subr.mxu0 0.0
  %1238 = vmatpush1.msra.mxu0 %v1208
  %1239 = vmatprep.subr.mxu0 0.0
  %1240 = vmatpush1.msra.mxu0 %v1207
  %1241 = vmatprep.subr.mxu0 0.0
  %1242 = vmatpush1.msra.mxu0 %v1206
  %1243 = vmatprep.subr.mxu0 0.0
  %1244 = vmatpush1.msra.mxu0 %v1205
  %1245 = vmatprep.subr.mxu0 0.0
  %1246 = vmatpush1.msra.mxu0 %v1204
  %1247 = vmatprep.subr.mxu0 0.0
  %1248 = vmatpush2.msra.mxu0 0.0
  %1249 = vmatprep.subr.mxu0 0.0
  %1250 = vmatpush2.msra.mxu0 0.0
  %1251 = vmatprep.subr.mxu0 0.0
  %1252 = vmatpush2.msra.mxu0 0.0
  %1253 = vmatprep.subr.mxu0 0.0
  %1254 = vmatpush2.msra.mxu0 0.0
  %1255 = vmatprep.subr.mxu0 0.0
  %1256 = vmatpush2.msra.mxu0 0.0
  %1257 = vmatprep.subr.mxu0 0.0
  %1258 = vmatpush2.msra.mxu0 0.0
  %1259 = vmatprep.subr.mxu0 0.0
  %1260 = vmatpush2.msra.mxu0 0.0
  %1261 = vmatprep.subr.mxu0 0.0
  %1262 = vmatpush2.msra.mxu0 0.0
  %1263 = vmatprep.subr.mxu0 0.0
  %1264 = vmatpush2.msra.mxu0 0.0
  %1265 = vmatprep.subr.mxu0 0.0
  %1266 = vmatpush2.msra.mxu0 0.0
  %1267 = vmatprep.subr.mxu0 0.0
  %1268 = vmatpush2.msra.mxu0 0.0
  %1269 = vmatprep.subr.mxu0 0.0
  %1270 = vmatpush2.msra.mxu0 0.0
  %1271 = vmatprep.subr.mxu0 0.0
  %1272 = vmatpush2.msra.mxu0 0.0
  %1273 = vmatprep.subr.mxu0 0.0
  %1274 = vmatpush2.msra.mxu0 0.0
  %1275 = vmatprep.subr.mxu0 0.0
  %1276 = vmatpush2.msra.mxu0 0.0
  %1277 = vmatprep.subr.mxu0 0.0
  %1278 = vmatpush2.msra.mxu0 0.0
  %1279 = vmatprep.mubr.f32.mxu0 0.0
  %1280 = vmatmul.mubr.f32.gmra.mxu0 %v1213
  %v1281 = vpop.f32.mrf.mxu0
  %v1282 = vadd.f32 0.0, %v1281
  %v1283 = vpop.f32.mrf.mxu0
  %1284 = vdwg.mxu0
  %v1285 = vadd.f32 %v1203, %v1282
  %v1286 = vld [vmem:[%s1 + $0x260] sm:$0x1]
  %v1287 = vlaneseq
  %v1288 = vshrl.u32 %v1287, 7
  %v1289 = vsub.s32 0, %v1288
  %v1290 = vrot.slane %v1286, %v1289
  %v1291 = vadd.f32 %v1285, %v1290
  %v1292 = vmax.f32 %v1291, 0.0
  %v1293 = vsel %vm775, %v956, 0.0
  %v1294 = vsel %vm775, %v957, 0.0
  %v1295 = vadd.f32 %v1293, %v1294
  %v1296 = vsel %vm775, %v958, 0.0
  %v1297 = vadd.f32 %v1295, %v1296
  %v1298 = vsel %vm775, %v959, 0.0
  %v1299 = vadd.f32 %v1297, %v1298
  %v1300 = vld [vmem:[%s1 + $0x268] sm:$0xff]
  %v1301 = vld [vmem:[%s1 + $0x270] sm:$0xff]
  %v1302 = vld [vmem:[%s1 + $0x278] sm:$0xff]
  %v1303 = vld [vmem:[%s1 + $0x280] sm:$0xff]
  %v1304 = vld [vmem:[%s1 + $0x288] sm:$0xff]
  %v1305 = vld [vmem:[%s1 + $0x290] sm:$0xff]
  %v1306 = vld [vmem:[%s1 + $0x298] sm:$0xff]
  %v1307 = vld [vmem:[%s1 + $0x2a0] sm:$0xff]
  %v1309 = vsel %vm775, %v1299, 0
  %1311 = vmatprep.subr.mxu0 0.0
  %1312 = vmatpush1.msra.mxu0 0.0
  %1313 = vmatprep.subr.mxu0 0.0
  %1314 = vmatpush1.msra.mxu0 0.0
  %1315 = vmatprep.subr.mxu0 0.0
  %1316 = vmatpush1.msra.mxu0 0.0
  %1317 = vmatprep.subr.mxu0 0.0
  %1318 = vmatpush1.msra.mxu0 0.0
  %1319 = vmatprep.subr.mxu0 0.0
  %1320 = vmatpush1.msra.mxu0 0.0
  %1321 = vmatprep.subr.mxu0 0.0
  %1322 = vmatpush1.msra.mxu0 0.0
  %1323 = vmatprep.subr.mxu0 0.0
  %1324 = vmatpush1.msra.mxu0 0.0
  %1325 = vmatprep.subr.mxu0 0.0
  %1326 = vmatpush1.msra.mxu0 0.0
  %1327 = vmatprep.subr.mxu0 0.0
  %1328 = vmatpush1.msra.mxu0 %v1307
  %1329 = vmatprep.subr.mxu0 0.0
  %1330 = vmatpush1.msra.mxu0 %v1306
  %1331 = vmatprep.subr.mxu0 0.0
  %1332 = vmatpush1.msra.mxu0 %v1305
  %1333 = vmatprep.subr.mxu0 0.0
  %1334 = vmatpush1.msra.mxu0 %v1304
  %1335 = vmatprep.subr.mxu0 0.0
  %1336 = vmatpush1.msra.mxu0 %v1303
  %1337 = vmatprep.subr.mxu0 0.0
  %1338 = vmatpush1.msra.mxu0 %v1302
  %1339 = vmatprep.subr.mxu0 0.0
  %1340 = vmatpush1.msra.mxu0 %v1301
  %1341 = vmatprep.subr.mxu0 0.0
  %1342 = vmatpush1.msra.mxu0 %v1300
  %1343 = vmatprep.subr.mxu0 0.0
  %1344 = vmatpush2.msra.mxu0 0.0
  %1345 = vmatprep.subr.mxu0 0.0
  %1346 = vmatpush2.msra.mxu0 0.0
  %1347 = vmatprep.subr.mxu0 0.0
  %1348 = vmatpush2.msra.mxu0 0.0
  %1349 = vmatprep.subr.mxu0 0.0
  %1350 = vmatpush2.msra.mxu0 0.0
  %1351 = vmatprep.subr.mxu0 0.0
  %1352 = vmatpush2.msra.mxu0 0.0
  %1353 = vmatprep.subr.mxu0 0.0
  %1354 = vmatpush2.msra.mxu0 0.0
  %1355 = vmatprep.subr.mxu0 0.0
  %1356 = vmatpush2.msra.mxu0 0.0
  %1357 = vmatprep.subr.mxu0 0.0
  %1358 = vmatpush2.msra.mxu0 0.0
  %1359 = vmatprep.subr.mxu0 0.0
  %1360 = vmatpush2.msra.mxu0 0.0
  %1361 = vmatprep.subr.mxu0 0.0
  %1362 = vmatpush2.msra.mxu0 0.0
  %1363 = vmatprep.subr.mxu0 0.0
  %1364 = vmatpush2.msra.mxu0 0.0
  %1365 = vmatprep.subr.mxu0 0.0
  %1366 = vmatpush2.msra.mxu0 0.0
  %1367 = vmatprep.subr.mxu0 0.0
  %1368 = vmatpush2.msra.mxu0 0.0
  %1369 = vmatprep.subr.mxu0 0.0
  %1370 = vmatpush2.msra.mxu0 0.0
  %1371 = vmatprep.subr.mxu0 0.0
  %1372 = vmatpush2.msra.mxu0 0.0
  %1373 = vmatprep.subr.mxu0 0.0
  %1374 = vmatpush2.msra.mxu0 0.0
  %1375 = vmatprep.mubr.f32.mxu0 0.0
  %1376 = vmatmul.mubr.f32.gmra.mxu0 %v1309
  %v1377 = vpop.f32.mrf.mxu0
  %v1378 = vadd.f32 0.0, %v1377
  %v1379 = vpop.f32.mrf.mxu0
  %1380 = vdwg.mxu0
  %v1381 = vmax.f32 %v1378, 0.0
  %v1382 = vld [vmem:[%s1 + $0x2a8] sm:$0xff]
  %v1383 = vld [vmem:[%s1 + $0x2b0] sm:$0xff]
  %v1384 = vld [vmem:[%s1 + $0x2b8] sm:$0xff]
  %v1385 = vld [vmem:[%s1 + $0x2c0] sm:$0xff]
  %v1386 = vld [vmem:[%s1 + $0x2c8] sm:$0xff]
  %v1387 = vld [vmem:[%s1 + $0x2d0] sm:$0xff]
  %v1388 = vld [vmem:[%s1 + $0x2d8] sm:$0xff]
  %v1389 = vld [vmem:[%s1 + $0x2e0] sm:$0xff]
  %v1391 = vsel %vm775, %v1381, 0
  %1393 = vmatprep.subr.mxu0 0.0
  %1394 = vmatpush1.msra.mxu0 0.0
  %1395 = vmatprep.subr.mxu0 0.0
  %1396 = vmatpush1.msra.mxu0 0.0
  %1397 = vmatprep.subr.mxu0 0.0
  %1398 = vmatpush1.msra.mxu0 0.0
  %1399 = vmatprep.subr.mxu0 0.0
  %1400 = vmatpush1.msra.mxu0 0.0
  %1401 = vmatprep.subr.mxu0 0.0
  %1402 = vmatpush1.msra.mxu0 0.0
  %1403 = vmatprep.subr.mxu0 0.0
  %1404 = vmatpush1.msra.mxu0 0.0
  %1405 = vmatprep.subr.mxu0 0.0
  %1406 = vmatpush1.msra.mxu0 0.0
  %1407 = vmatprep.subr.mxu0 0.0
  %1408 = vmatpush1.msra.mxu0 0.0
  %1409 = vmatprep.subr.mxu0 0.0
  %1410 = vmatpush1.msra.mxu0 %v1389
  %1411 = vmatprep.subr.mxu0 0.0
  %1412 = vmatpush1.msra.mxu0 %v1388
  %1413 = vmatprep.subr.mxu0 0.0
  %1414 = vmatpush1.msra.mxu0 %v1387
  %1415 = vmatprep.subr.mxu0 0.0
  %1416 = vmatpush1.msra.mxu0 %v1386
  %1417 = vmatprep.subr.mxu0 0.0
  %1418 = vmatpush1.msra.mxu0 %v1385
  %1419 = vmatprep.subr.mxu0 0.0
  %1420 = vmatpush1.msra.mxu0 %v1384
  %1421 = vmatprep.subr.mxu0 0.0
  %1422 = vmatpush1.msra.mxu0 %v1383
  %1423 = vmatprep.subr.mxu0 0.0
  %1424 = vmatpush1.msra.mxu0 %v1382
  %1425 = vmatprep.subr.mxu0 0.0
  %1426 = vmatpush2.msra.mxu0 0.0
  %1427 = vmatprep.subr.mxu0 0.0
  %1428 = vmatpush2.msra.mxu0 0.0
  %1429 = vmatprep.subr.mxu0 0.0
  %1430 = vmatpush2.msra.mxu0 0.0
  %1431 = vmatprep.subr.mxu0 0.0
  %1432 = vmatpush2.msra.mxu0 0.0
  %1433 = vmatprep.subr.mxu0 0.0
  %1434 = vmatpush2.msra.mxu0 0.0
  %1435 = vmatprep.subr.mxu0 0.0
  %1436 = vmatpush2.msra.mxu0 0.0
  %1437 = vmatprep.subr.mxu0 0.0
  %1438 = vmatpush2.msra.mxu0 0.0
  %1439 = vmatprep.subr.mxu0 0.0
  %1440 = vmatpush2.msra.mxu0 0.0
  %1441 = vmatprep.subr.mxu0 0.0
  %1442 = vmatpush2.msra.mxu0 0.0
  %1443 = vmatprep.subr.mxu0 0.0
  %1444 = vmatpush2.msra.mxu0 0.0
  %1445 = vmatprep.subr.mxu0 0.0
  %1446 = vmatpush2.msra.mxu0 0.0
  %1447 = vmatprep.subr.mxu0 0.0
  %1448 = vmatpush2.msra.mxu0 0.0
  %1449 = vmatprep.subr.mxu0 0.0
  %1450 = vmatpush2.msra.mxu0 0.0
  %1451 = vmatprep.subr.mxu0 0.0
  %1452 = vmatpush2.msra.mxu0 0.0
  %1453 = vmatprep.subr.mxu0 0.0
  %1454 = vmatpush2.msra.mxu0 0.0
  %1455 = vmatprep.subr.mxu0 0.0
  %1456 = vmatpush2.msra.mxu0 0.0
  %1457 = vmatprep.mubr.f32.mxu0 0.0
  %1458 = vmatmul.mubr.f32.gmra.mxu0 %v1391
  %v1459 = vpop.f32.mrf.mxu0
  %v1460 = vadd.f32 0.0, %v1459
  %v1461 = vpop.f32.mrf.mxu0
  %1462 = vdwg.mxu0
  %v1463 = vxor.u32 %v1460, 2147483648
  %v1464 = vmul.f32 %v1463, 1.442695
  %v1465 = vpow.pop %v1464
  %v1466 = vadd.f32 %v1465, 1.0
  %v1467 = vrcp.pop %v1466
  %v1468 = vmul.f32 1.0, %v1467
  %v1469 = vmul.f32 %v1292, %v1468
  %v1470 = vld [vmem:[%s1 + $0x3e8] sm:$0x1]
  %v1471 = vlaneseq
  %v1472 = vshrl.u32 %v1471, 7
  %v1473 = vsub.s32 0, %v1472
  %v1474 = vrot.slane %v1470, %v1473
  %v1475 = vadd.f32 %v1474, 0.0
  %v1476 = vmul.f32 %v1469, %v956
  %v1477 = vld [vmem:[%s1 + $0x2e8] sm:$0xff]
  %v1478 = vld [vmem:[%s1 + $0x2f0] sm:$0xff]
  %v1479 = vld [vmem:[%s1 + $0x2f8] sm:$0xff]
  %v1480 = vld [vmem:[%s1 + $0x300] sm:$0xff]
  %v1481 = vld [vmem:[%s1 + $0x308] sm:$0xff]
  %v1482 = vld [vmem:[%s1 + $0x310] sm:$0xff]
  %v1483 = vld [vmem:[%s1 + $0x318] sm:$0xff]
  %v1484 = vld [vmem:[%s1 + $0x320] sm:$0xff]
  %v1486 = vsel %vm775, %v1476, 0
  %1488 = vmatprep.subr.mxu0 0.0
  %1489 = vmatpush1.msra.mxu0 0.0
  %1490 = vmatprep.subr.mxu0 0.0
  %1491 = vmatpush1.msra.mxu0 0.0
  %1492 = vmatprep.subr.mxu0 0.0
  %1493 = vmatpush1.msra.mxu0 0.0
  %1494 = vmatprep.subr.mxu0 0.0
  %1495 = vmatpush1.msra.mxu0 0.0
  %1496 = vmatprep.subr.mxu0 0.0
  %1497 = vmatpush1.msra.mxu0 0.0
  %1498 = vmatprep.subr.mxu0 0.0
  %1499 = vmatpush1.msra.mxu0 0.0
  %1500 = vmatprep.subr.mxu0 0.0
  %1501 = vmatpush1.msra.mxu0 0.0
  %1502 = vmatprep.subr.mxu0 0.0
  %1503 = vmatpush1.msra.mxu0 0.0
  %1504 = vmatprep.subr.mxu0 0.0
  %1505 = vmatpush1.msra.mxu0 %v1484
  %1506 = vmatprep.subr.mxu0 0.0
  %1507 = vmatpush1.msra.mxu0 %v1483
  %1508 = vmatprep.subr.mxu0 0.0
  %1509 = vmatpush1.msra.mxu0 %v1482
  %1510 = vmatprep.subr.mxu0 0.0
  %1511 = vmatpush1.msra.mxu0 %v1481
  %1512 = vmatprep.subr.mxu0 0.0
  %1513 = vmatpush1.msra.mxu0 %v1480
  %1514 = vmatprep.subr.mxu0 0.0
  %1515 = vmatpush1.msra.mxu0 %v1479
  %1516 = vmatprep.subr.mxu0 0.0
  %1517 = vmatpush1.msra.mxu0 %v1478
  %1518 = vmatprep.subr.mxu0 0.0
  %1519 = vmatpush1.msra.mxu0 %v1477
  %1520 = vmatprep.subr.mxu0 0.0
  %1521 = vmatpush2.msra.mxu0 0.0
  %1522 = vmatprep.subr.mxu0 0.0
  %1523 = vmatpush2.msra.mxu0 0.0
  %1524 = vmatprep.subr.mxu0 0.0
  %1525 = vmatpush2.msra.mxu0 0.0
  %1526 = vmatprep.subr.mxu0 0.0
  %1527 = vmatpush2.msra.mxu0 0.0
  %1528 = vmatprep.subr.mxu0 0.0
  %1529 = vmatpush2.msra.mxu0 0.0
  %1530 = vmatprep.subr.mxu0 0.0
  %1531 = vmatpush2.msra.mxu0 0.0
  %1532 = vmatprep.subr.mxu0 0.0
  %1533 = vmatpush2.msra.mxu0 0.0
  %1534 = vmatprep.subr.mxu0 0.0
  %1535 = vmatpush2.msra.mxu0 0.0
  %1536 = vmatprep.subr.mxu0 0.0
  %1537 = vmatpush2.msra.mxu0 0.0
  %1538 = vmatprep.subr.mxu0 0.0
  %1539 = vmatpush2.msra.mxu0 0.0
  %1540 = vmatprep.subr.mxu0 0.0
  %1541 = vmatpush2.msra.mxu0 0.0
  %1542 = vmatprep.subr.mxu0 0.0
  %1543 = vmatpush2.msra.mxu0 0.0
  %1544 = vmatprep.subr.mxu0 0.0
  %1545 = vmatpush2.msra.mxu0 0.0
  %1546 = vmatprep.subr.mxu0 0.0
  %1547 = vmatpush2.msra.mxu0 0.0
  %1548 = vmatprep.subr.mxu0 0.0
  %1549 = vmatpush2.msra.mxu0 0.0
  %1550 = vmatprep.subr.mxu0 0.0
  %1551 = vmatpush2.msra.mxu0 0.0
  %1552 = vmatprep.mubr.f32.mxu0 0.0
  %1553 = vmatmul.mubr.f32.gmra.mxu0 %v1486
  %v1554 = vpop.f32.mrf.mxu0
  %v1555 = vadd.f32 0.0, %v1554
  %v1556 = vpop.f32.mrf.mxu0
  %1557 = vdwg.mxu0
  %v1558 = vadd.f32 %v1475, %v1555
  %v1559 = vmul.f32 %v1469, %v957
  %v1560 = vld [vmem:[%s1 + $0x328] sm:$0xff]
  %v1561 = vld [vmem:[%s1 + $0x330] sm:$0xff]
  %v1562 = vld [vmem:[%s1 + $0x338] sm:$0xff]
  %v1563 = vld [vmem:[%s1 + $0x340] sm:$0xff]
  %v1564 = vld [vmem:[%s1 + $0x348] sm:$0xff]
  %v1565 = vld [vmem:[%s1 + $0x350] sm:$0xff]
  %v1566 = vld [vmem:[%s1 + $0x358] sm:$0xff]
  %v1567 = vld [vmem:[%s1 + $0x360] sm:$0xff]
  %v1569 = vsel %vm775, %v1559, 0
  %1571 = vmatprep.subr.mxu0 0.0
  %1572 = vmatpush1.msra.mxu0 0.0
  %1573 = vmatprep.subr.mxu0 0.0
  %1574 = vmatpush1.msra.mxu0 0.0
  %1575 = vmatprep.subr.mxu0 0.0
  %1576 = vmatpush1.msra.mxu0 0.0
  %1577 = vmatprep.subr.mxu0 0.0
  %1578 = vmatpush1.msra.mxu0 0.0
  %1579 = vmatprep.subr.mxu0 0.0
  %1580 = vmatpush1.msra.mxu0 0.0
  %1581 = vmatprep.subr.mxu0 0.0
  %1582 = vmatpush1.msra.mxu0 0.0
  %1583 = vmatprep.subr.mxu0 0.0
  %1584 = vmatpush1.msra.mxu0 0.0
  %1585 = vmatprep.subr.mxu0 0.0
  %1586 = vmatpush1.msra.mxu0 0.0
  %1587 = vmatprep.subr.mxu0 0.0
  %1588 = vmatpush1.msra.mxu0 %v1567
  %1589 = vmatprep.subr.mxu0 0.0
  %1590 = vmatpush1.msra.mxu0 %v1566
  %1591 = vmatprep.subr.mxu0 0.0
  %1592 = vmatpush1.msra.mxu0 %v1565
  %1593 = vmatprep.subr.mxu0 0.0
  %1594 = vmatpush1.msra.mxu0 %v1564
  %1595 = vmatprep.subr.mxu0 0.0
  %1596 = vmatpush1.msra.mxu0 %v1563
  %1597 = vmatprep.subr.mxu0 0.0
  %1598 = vmatpush1.msra.mxu0 %v1562
  %1599 = vmatprep.subr.mxu0 0.0
  %1600 = vmatpush1.msra.mxu0 %v1561
  %1601 = vmatprep.subr.mxu0 0.0
  %1602 = vmatpush1.msra.mxu0 %v1560
  %1603 = vmatprep.subr.mxu0 0.0
  %1604 = vmatpush2.msra.mxu0 0.0
  %1605 = vmatprep.subr.mxu0 0.0
  %1606 = vmatpush2.msra.mxu0 0.0
  %1607 = vmatprep.subr.mxu0 0.0
  %1608 = vmatpush2.msra.mxu0 0.0
  %1609 = vmatprep.subr.mxu0 0.0
  %1610 = vmatpush2.msra.mxu0 0.0
  %1611 = vmatprep.subr.mxu0 0.0
  %1612 = vmatpush2.msra.mxu0 0.0
  %1613 = vmatprep.subr.mxu0 0.0
  %1614 = vmatpush2.msra.mxu0 0.0
  %1615 = vmatprep.subr.mxu0 0.0
  %1616 = vmatpush2.msra.mxu0 0.0
  %1617 = vmatprep.subr.mxu0 0.0
  %1618 = vmatpush2.msra.mxu0 0.0
  %1619 = vmatprep.subr.mxu0 0.0
  %1620 = vmatpush2.msra.mxu0 0.0
  %1621 = vmatprep.subr.mxu0 0.0
  %1622 = vmatpush2.msra.mxu0 0.0
  %1623 = vmatprep.subr.mxu0 0.0
  %1624 = vmatpush2.msra.mxu0 0.0
  %1625 = vmatprep.subr.mxu0 0.0
  %1626 = vmatpush2.msra.mxu0 0.0
  %1627 = vmatprep.subr.mxu0 0.0
  %1628 = vmatpush2.msra.mxu0 0.0
  %1629 = vmatprep.subr.mxu0 0.0
  %1630 = vmatpush2.msra.mxu0 0.0
  %1631 = vmatprep.subr.mxu0 0.0
  %1632 = vmatpush2.msra.mxu0 0.0
  %1633 = vmatprep.subr.mxu0 0.0
  %1634 = vmatpush2.msra.mxu0 0.0
  %1635 = vmatprep.mubr.f32.mxu0 0.0
  %1636 = vmatmul.mubr.f32.gmra.mxu0 %v1569
  %v1637 = vpop.f32.mrf.mxu0
  %v1638 = vadd.f32 0.0, %v1637
  %v1639 = vpop.f32.mrf.mxu0
  %1640 = vdwg.mxu0
  %v1641 = vadd.f32 %v1558, %v1638
  %v1642 = vmul.f32 %v1469, %v958
  %v1643 = vld [vmem:[%s1 + $0x368] sm:$0xff]
  %v1644 = vld [vmem:[%s1 + $0x370] sm:$0xff]
  %v1645 = vld [vmem:[%s1 + $0x378] sm:$0xff]
  %v1646 = vld [vmem:[%s1 + $0x380] sm:$0xff]
  %v1647 = vld [vmem:[%s1 + $0x388] sm:$0xff]
  %v1648 = vld [vmem:[%s1 + $0x390] sm:$0xff]
  %v1649 = vld [vmem:[%s1 + $0x398] sm:$0xff]
  %v1650 = vld [vmem:[%s1 + $0x3a0] sm:$0xff]
  %v1652 = vsel %vm775, %v1642, 0
  %1654 = vmatprep.subr.mxu0 0.0
  %1655 = vmatpush1.msra.mxu0 0.0
  %1656 = vmatprep.subr.mxu0 0.0
  %1657 = vmatpush1.msra.mxu0 0.0
  %1658 = vmatprep.subr.mxu0 0.0
  %1659 = vmatpush1.msra.mxu0 0.0
  %1660 = vmatprep.subr.mxu0 0.0
  %1661 = vmatpush1.msra.mxu0 0.0
  %1662 = vmatprep.subr.mxu0 0.0
  %1663 = vmatpush1.msra.mxu0 0.0
  %1664 = vmatprep.subr.mxu0 0.0
  %1665 = vmatpush1.msra.mxu0 0.0
  %1666 = vmatprep.subr.mxu0 0.0
  %1667 = vmatpush1.msra.mxu0 0.0
  %1668 = vmatprep.subr.mxu0 0.0
  %1669 = vmatpush1.msra.mxu0 0.0
  %1670 = vmatprep.subr.mxu0 0.0
  %1671 = vmatpush1.msra.mxu0 %v1650
  %1672 = vmatprep.subr.mxu0 0.0
  %1673 = vmatpush1.msra.mxu0 %v1649
  %1674 = vmatprep.subr.mxu0 0.0
  %1675 = vmatpush1.msra.mxu0 %v1648
  %1676 = vmatprep.subr.mxu0 0.0
  %1677 = vmatpush1.msra.mxu0 %v1647
  %1678 = vmatprep.subr.mxu0 0.0
  %1679 = vmatpush1.msra.mxu0 %v1646
  %1680 = vmatprep.subr.mxu0 0.0
  %1681 = vmatpush1.msra.mxu0 %v1645
  %1682 = vmatprep.subr.mxu0 0.0
  %1683 = vmatpush1.msra.mxu0 %v1644
  %1684 = vmatprep.subr.mxu0 0.0
  %1685 = vmatpush1.msra.mxu0 %v1643
  %1686 = vmatprep.subr.mxu0 0.0
  %1687 = vmatpush2.msra.mxu0 0.0
  %1688 = vmatprep.subr.mxu0 0.0
  %1689 = vmatpush2.msra.mxu0 0.0
  %1690 = vmatprep.subr.mxu0 0.0
  %1691 = vmatpush2.msra.mxu0 0.0
  %1692 = vmatprep.subr.mxu0 0.0
  %1693 = vmatpush2.msra.mxu0 0.0
  %1694 = vmatprep.subr.mxu0 0.0
  %1695 = vmatpush2.msra.mxu0 0.0
  %1696 = vmatprep.subr.mxu0 0.0
  %1697 = vmatpush2.msra.mxu0 0.0
  %1698 = vmatprep.subr.mxu0 0.0
  %1699 = vmatpush2.msra.mxu0 0.0
  %1700 = vmatprep.subr.mxu0 0.0
  %1701 = vmatpush2.msra.mxu0 0.0
  %1702 = vmatprep.subr.mxu0 0.0
  %1703 = vmatpush2.msra.mxu0 0.0
  %1704 = vmatprep.subr.mxu0 0.0
  %1705 = vmatpush2.msra.mxu0 0.0
  %1706 = vmatprep.subr.mxu0 0.0
  %1707 = vmatpush2.msra.mxu0 0.0
  %1708 = vmatprep.subr.mxu0 0.0
  %1709 = vmatpush2.msra.mxu0 0.0
  %1710 = vmatprep.subr.mxu0 0.0
  %1711 = vmatpush2.msra.mxu0 0.0
  %1712 = vmatprep.subr.mxu0 0.0
  %1713 = vmatpush2.msra.mxu0 0.0
  %1714 = vmatprep.subr.mxu0 0.0
  %1715 = vmatpush2.msra.mxu0 0.0
  %1716 = vmatprep.subr.mxu0 0.0
  %1717 = vmatpush2.msra.mxu0 0.0
  %1718 = vmatprep.mubr.f32.mxu0 0.0
  %1719 = vmatmul.mubr.f32.gmra.mxu0 %v1652
  %v1720 = vpop.f32.mrf.mxu0
  %v1721 = vadd.f32 0.0, %v1720
  %v1722 = vpop.f32.mrf.mxu0
  %1723 = vdwg.mxu0
  %v1724 = vadd.f32 %v1641, %v1721
  %v1725 = vmul.f32 %v1469, %v959
  %v1726 = vld [vmem:[%s1 + $0x3a8] sm:$0xff]
  %v1727 = vld [vmem:[%s1 + $0x3b0] sm:$0xff]
  %v1728 = vld [vmem:[%s1 + $0x3b8] sm:$0xff]
  %v1729 = vld [vmem:[%s1 + $0x3c0] sm:$0xff]
  %v1730 = vld [vmem:[%s1 + $0x3c8] sm:$0xff]
  %v1731 = vld [vmem:[%s1 + $0x3d0] sm:$0xff]
  %v1732 = vld [vmem:[%s1 + $0x3d8] sm:$0xff]
  %v1733 = vld [vmem:[%s1 + $0x3e0] sm:$0xff]
  %v1735 = vsel %vm775, %v1725, 0
  %1737 = vmatprep.subr.mxu0 0.0
  %1738 = vmatpush1.msra.mxu0 0.0
  %1739 = vmatprep.subr.mxu0 0.0
  %1740 = vmatpush1.msra.mxu0 0.0
  %1741 = vmatprep.subr.mxu0 0.0
  %1742 = vmatpush1.msra.mxu0 0.0
  %1743 = vmatprep.subr.mxu0 0.0
  %1744 = vmatpush1.msra.mxu0 0.0
  %1745 = vmatprep.subr.mxu0 0.0
  %1746 = vmatpush1.msra.mxu0 0.0
  %1747 = vmatprep.subr.mxu0 0.0
  %1748 = vmatpush1.msra.mxu0 0.0
  %1749 = vmatprep.subr.mxu0 0.0
  %1750 = vmatpush1.msra.mxu0 0.0
  %1751 = vmatprep.subr.mxu0 0.0
  %1752 = vmatpush1.msra.mxu0 0.0
  %1753 = vmatprep.subr.mxu0 0.0
  %1754 = vmatpush1.msra.mxu0 %v1733
  %1755 = vmatprep.subr.mxu0 0.0
  %1756 = vmatpush1.msra.mxu0 %v1732
  %1757 = vmatprep.subr.mxu0 0.0
  %1758 = vmatpush1.msra.mxu0 %v1731
  %1759 = vmatprep.subr.mxu0 0.0
  %1760 = vmatpush1.msra.mxu0 %v1730
  %1761 = vmatprep.subr.mxu0 0.0
  %1762 = vmatpush1.msra.mxu0 %v1729
  %1763 = vmatprep.subr.mxu0 0.0
  %1764 = vmatpush1.msra.mxu0 %v1728
  %1765 = vmatprep.subr.mxu0 0.0
  %1766 = vmatpush1.msra.mxu0 %v1727
  %1767 = vmatprep.subr.mxu0 0.0
  %1768 = vmatpush1.msra.mxu0 %v1726
  %1769 = vmatprep.subr.mxu0 0.0
  %1770 = vmatpush2.msra.mxu0 0.0
  %1771 = vmatprep.subr.mxu0 0.0
  %1772 = vmatpush2.msra.mxu0 0.0
  %1773 = vmatprep.subr.mxu0 0.0
  %1774 = vmatpush2.msra.mxu0 0.0
  %1775 = vmatprep.subr.mxu0 0.0
  %1776 = vmatpush2.msra.mxu0 0.0
  %1777 = vmatprep.subr.mxu0 0.0
  %1778 = vmatpush2.msra.mxu0 0.0
  %1779 = vmatprep.subr.mxu0 0.0
  %1780 = vmatpush2.msra.mxu0 0.0
  %1781 = vmatprep.subr.mxu0 0.0
  %1782 = vmatpush2.msra.mxu0 0.0
  %1783 = vmatprep.subr.mxu0 0.0
  %1784 = vmatpush2.msra.mxu0 0.0
  %1785 = vmatprep.subr.mxu0 0.0
  %1786 = vmatpush2.msra.mxu0 0.0
  %1787 = vmatprep.subr.mxu0 0.0
  %1788 = vmatpush2.msra.mxu0 0.0
  %1789 = vmatprep.subr.mxu0 0.0
  %1790 = vmatpush2.msra.mxu0 0.0
  %1791 = vmatprep.subr.mxu0 0.0
  %1792 = vmatpush2.msra.mxu0 0.0
  %1793 = vmatprep.subr.mxu0 0.0
  %1794 = vmatpush2.msra.mxu0 0.0
  %1795 = vmatprep.subr.mxu0 0.0
  %1796 = vmatpush2.msra.mxu0 0.0
  %1797 = vmatprep.subr.mxu0 0.0
  %1798 = vmatpush2.msra.mxu0 0.0
  %1799 = vmatprep.subr.mxu0 0.0
  %1800 = vmatpush2.msra.mxu0 0.0
  %1801 = vmatprep.mubr.f32.mxu0 0.0
  %1802 = vmatmul.mubr.f32.gmra.mxu0 %v1735
  %v1803 = vpop.f32.mrf.mxu0
  %v1804 = vadd.f32 0.0, %v1803
  %v1805 = vpop.f32.mrf.mxu0
  %1806 = vdwg.mxu0
  %v1807 = vadd.f32 %v1724, %v1804
  %vm1808 = vcmask 31744
  %v1809 = vsel %vm1808, %v1807, -inf
  %1810 = vmax.xlane.f32.xlu0 %v1809
  %v1811 = vpop.xlane.xlu0 %1810
  %v1812 = vsub.f32 %v1807, %v1811
  %v1813 = vmul.f32 %v1812, 1.442695
  %v1814 = vpow.pop %v1813
  %v1815 = vsel %vm1808, %v1814, 0.0
  %1816 = vadd.xlane.f32.xlu0 %v1815
  %v1817 = vpop.xlane.xlu0 %1816
  %v1818 = vrcp.pop %v1817
  %v1819 = vmul.f32 %v1814, %v1818
  %1820 = vst.msk [vmem:[%s2] sm:$0xff] %vm1808, %v1819
  // Predicated region
  $region10: #{player_forward_pallas.1} parent=0 // pred_check
    _
  $region11: #{player_forward_pallas.1} parent=0 // pred_check_branch
    %1822 = sbr.rel (0) target = $region13
  $region12: #{player_forward_pallas.1} parent=0 // pred_region
    _
  $region13: #{player_forward_pallas.1} parent=0 // pred_fallthru
    _
  // Predicated region
  $region14: #{player_forward_pallas.1} parent=0 // pred_check
    _
  $region15: #{player_forward_pallas.1} parent=0 // pred_check_branch
    %1824 = sbr.rel (0) target = $region17
  $region16: #{player_forward_pallas.1} parent=0 // pred_region
    _
  $region17: #{player_forward_pallas.1} parent=0 // pred_fallthru
    _

</llo_original>
